<compile_context>
chip_gen: v6e
topology: v6e:2x2x1
jax: 0.10.0
libtpu: 0.0.40
codegen_flags: <defaults>
</compile_context>

<pallas_src>
import functools

import jax
import jax.numpy as jnp
from jax.experimental import pallas as pl
from jax.experimental.pallas import tpu as pltpu


def _round_up(x, m):
    return (x + m - 1) // m * m


def _linear_kernel(h_ref, w_ref, b_ref, o_ref):
    # h_ref: [B_pad, K_pad] bf16, w_ref: [K_pad, tn] bf16,
    # b_ref: [1, tn] f32,          o_ref: [B_pad, tn] f32
    acc = jnp.dot(h_ref[...], w_ref[...], preferred_element_type=jnp.float32)
    o_ref[...] = (acc + b_ref[...]).astype(o_ref.dtype)


def _default_n_blocks():
    """Split N across 2 blocks only on v7x (2 TensorCores/chip); 1 elsewhere."""
    try:
        kind = jax.devices()[0].device_kind.lower()
    except Exception:
        return 1
    return 2 if ("v7" in kind or "7x" in kind) else 1


def prepare_linear_params(weight, bias, *, lane=128, weight_dtype=jnp.bfloat16):
    """One-time parameter prep (NOT in the per-call hot path).

    weight: [N, K] (PyTorch nn.Linear layout), bias: [N].
    Returns (w_kn, b_1n, n_out): pre-transposed, zero-padded bf16 weight
    [K_pad, N_pad]; padded f32 bias [1, N_pad]; true output width N.
    """
    N, K = weight.shape
    K_pad, N_pad = _round_up(K, lane), _round_up(N, lane)
    w_kn = jnp.zeros((K_pad, N_pad), weight_dtype)
    w_kn = w_kn.at[:K, :N].set(weight.T.astype(weight_dtype))
    b_1n = jnp.zeros((1, N_pad), jnp.float32).at[:, :N].set(bias.astype(jnp.float32))
    return w_kn, b_1n, N


def linear_classifier(h, w_kn, b_1n, n_out, *, n_blocks=None):
    """Forward pass: logits = h @ W.T + b (raw logits, no softmax).

    h: [B, K] float; w_kn: [K_pad, N_pad] bf16 from prepare_linear_params;
    b_1n: [1, N_pad] f32; n_out: true number of classes.
    """
    B, K = h.shape
    K_pad, N_pad = w_kn.shape
    if n_blocks is None:
        n_blocks = _default_n_blocks()
    assert N_pad % n_blocks == 0
    tn = N_pad // n_blocks

    # Pad batch to a sublane multiple (8) and K to the lane-padded width, and
    # cast activations to bf16 so both MXU operands are bf16.  This is a few KB
    # -- negligible next to the ~2 MB bf16 weight stream.
    B_pad = _round_up(max(B, 1), 8)
    h_p = jnp.zeros((B_pad, K_pad), w_kn.dtype).at[:B, :K].set(h.astype(w_kn.dtype))

    bytes_accessed = (
        w_kn.size * w_kn.dtype.itemsize
        + h_p.size * h_p.dtype.itemsize
        + b_1n.size * b_1n.dtype.itemsize
        + B_pad * N_pad * 4
    )

    out_pad = pl.pallas_call(
        _linear_kernel,
        out_shape=jax.ShapeDtypeStruct((B_pad, N_pad), jnp.float32),
        grid_spec=pltpu.PrefetchScalarGridSpec(
            num_scalar_prefetch=0,
            grid=(n_blocks,),
            in_specs=[
                pl.BlockSpec((B_pad, K_pad), lambda j: (0, 0)),   # activations
                pl.BlockSpec((K_pad, tn), lambda j: (0, j)),      # weight [K,N]
                pl.BlockSpec((1, tn), lambda j: (0, j)),          # bias
            ],
            out_specs=pl.BlockSpec((B_pad, tn), lambda j: (0, j)),
        ),
        compiler_params=pltpu.CompilerParams(
            dimension_semantics=("parallel",)),
        cost_estimate=pl.CostEstimate(
            flops=2 * B_pad * K_pad * N_pad,
            transcendentals=0,
            bytes_accessed=bytes_accessed),
    )(h_p, w_kn, b_1n)

    return out_pad[:B, :n_out].astype(h.dtype)


if __name__ == "__main__":
    # Module shapes: encoder_out_dim = out_dim_dict['resnet50'] = 1000,
    # n_class = 1000. Small batch = 2.
    B, K, N = 2, 1000, 1000

    key = jax.random.PRNGKey(0)
    kh, kw, kb = jax.random.split(key, 3)

    # Deterministic init mimicking nn.Linear default: U(-1/sqrt(K), 1/sqrt(K)).
    bound = 1.0 / (K ** 0.5)
    weight = jax.random.uniform(kw, (N, K), jnp.float32, -bound, bound)
    bias = jax.random.uniform(kb, (N,), jnp.float32, -bound, bound)
    h = jax.random.normal(kh, (B, K), jnp.float32)

    # One-time parameter prep (transpose + pad + bf16 cast), outside hot path.
    w_kn, b_1n, n_out = prepare_linear_params(weight, bias)

    fwd = jax.jit(functools.partial(linear_classifier, n_out=n_out))
    pred = jax.block_until_ready(fwd(h, w_kn, b_1n))

    assert pred.shape == (B, N)
    assert pred.dtype == h.dtype

    # Tight check against a reference using the same bf16-quantized inputs
    # with f32 accumulation (isolates kernel correctness from quantization).
    ref_bf16 = (h.astype(jnp.bfloat16).astype(jnp.float32)
                @ weight.T.astype(jnp.bfloat16).astype(jnp.float32)) + bias
    assert jnp.allclose(pred, ref_bf16, atol=1e-3, rtol=1e-3)

    # Loose check against the full-f32 PyTorch-equivalent forward (bf16 weight
    # quantization error on a classifier head is ~1e-2 absolute on logits).
    ref_f32 = h @ weight.T + bias
    assert jnp.allclose(pred, ref_f32, atol=5e-2, rtol=5e-2)

    print("KERNEL_OK")
</pallas_src>

<mosaic_0001>
module attributes {stable_mosaic.version = 11 : i64} {
  func.func @_linear_kernel(%arg0: i32, %arg1: memref<8x1024xbf16, #tpu.memory_space<vmem>>, %arg2: memref<1024x1024xbf16, #tpu.memory_space<vmem>>, %arg3: memref<1x1024xf32, #tpu.memory_space<vmem>>, %arg4: memref<8x1024xf32, #tpu.memory_space<vmem>>) attributes {dimension_semantics = [#tpu.dimension_semantics<parallel>], iteration_bounds = array<i64: 1>, scalar_prefetch = 0 : i64, scratch_operands = 0 : i64, tpu.core_type = #tpu.core_type<tc>, window_params = [{pipeline_mode = #tpu.pipeline_mode<synchronous>, transform_indices = @transform_0, window_bounds = array<i64: 8, 1024>}, {transform_indices = @transform_1, window_bounds = array<i64: 1024, 1024>}, {transform_indices = @transform_2, window_bounds = array<i64: 1, 1024>}, {transform_indices = @transform_3, window_bounds = array<i64: 8, 1024>}]} {
    %c0 = arith.constant 0 : index
    %c0_0 = arith.constant 0 : index
    %0 = vector.load %arg1[%c0, %c0_0] : memref<8x1024xbf16, #tpu.memory_space<vmem>>, vector<8x1024xbf16>
    %c0_1 = arith.constant 0 : index
    %c0_2 = arith.constant 0 : index
    %1 = vector.load %arg2[%c0_1, %c0_2] : memref<1024x1024xbf16, #tpu.memory_space<vmem>>, vector<1024x1024xbf16>
    %cst = arith.constant dense<0.000000e+00> : vector<8x1024xf32>
    %2 = tpu.matmul %0, %1, %cst {dimension_numbers = #tpu.dot_dimension_numbers<[1], [0], [0], [1], [0, 0, 1, 1], [], []>} : vector<8x1024xbf16>, vector<1024x1024xbf16>, vector<8x1024xf32> -> vector<8x1024xf32>
    %c0_3 = arith.constant 0 : index
    %c0_4 = arith.constant 0 : index
    %3 = vector.load %arg3[%c0_3, %c0_4] : memref<1x1024xf32, #tpu.memory_space<vmem>>, vector<1x1024xf32>
    %4 = vector.broadcast %3 : vector<1x1024xf32> to vector<8x1024xf32>
    %5 = arith.addf %2, %4 : vector<8x1024xf32>
    %c0_5 = arith.constant 0 : index
    %c0_6 = arith.constant 0 : index
    %6 = vector.load %arg4[%c0_5, %c0_6] : memref<8x1024xf32, #tpu.memory_space<vmem>>, vector<8x1024xf32>
    tpu.vector_store %arg4[%c0_5, %c0_6], %5 {strides = array<i32>} : memref<8x1024xf32, #tpu.memory_space<vmem>>, vector<8x1024xf32>,
    return
  }
  func.func @transform_0(%arg0: i32) -> (i32, i32) {
    %c0_i32 = arith.constant 0 : i32
    %c0_i32_0 = arith.constant 0 : i32
    %c0_i32_1 = arith.constant 0 : i32
    return %c0_i32, %c0_i32_0 : i32, i32
  }
  func.func @transform_1(%arg0: i32) -> (i32, i32) {
    %c0_i32 = arith.constant 0 : i32
    %c0_i32_0 = arith.constant 0 : i32
    return %c0_i32, %arg0 : i32, i32
  }
  func.func @transform_2(%arg0: i32) -> (i32, i32) {
    %c0_i32 = arith.constant 0 : i32
    %c0_i32_0 = arith.constant 0 : i32
    return %c0_i32, %arg0 : i32, i32
  }
  func.func @transform_3(%arg0: i32) -> (i32, i32) {
    %c0_i32 = arith.constant 0 : i32
    %c0_i32_0 = arith.constant 0 : i32
    return %c0_i32, %arg0 : i32, i32
  }
}

</mosaic_0001>

<llo_original>
// kernel: linear_classifier.1
$region0: #{linear_classifier.1}
  #allocation0 [shape = 'u32[]', space=smem, size = 0x4, offset = 0x4, fixed_abs, tag = 'smem constant byte address 0x4 - core index']
  #allocation1 [shape = 'u32[144,128]{1,0:T(1,128)}', space=vmem, size = 0x12000, scoped, tag = 'internal scratch']
  %s0 = inlined_call_operand.vmem [shape: bf16[8,1024], index: 0, kind: input, shape index: {}]
  %s1 = inlined_call_operand.hbm [shape: bf16[1024,1024], index: 1, kind: input, shape index: {}]
  %s2 = inlined_call_operand.hbm [shape: f32[1,1024], index: 2, kind: input, shape index: {}]
  %s3 = inlined_call_operand.vmem [shape: f32[8,1024], index: 3, kind: output, shape index: {}]
  %s4 = sld [smem:[#allocation0]]
  $region30: #{linear_classifier.1} parent=0
    _
  %s6 = ssub.s32 1, %s4
  %s7 = scalar_select 0, %s6, %s4
  $region1: #{linear_classifier.1} parent=0
    #allocation2 [shape = 'u8[2097152]{0}', space=vmem, size = 0x200000, scoped, tag = 'input window, operand 1, single buffered']
    #allocation3 [shape = 's32[1]{0}', space=sflag, size = 0x4, scoped, tag = 'scoped memory for linear_classifier.1']
    #allocation4 [shape = 'u8[4096]{0}', space=vmem, size = 0x1000, scoped, tag = 'input window, operand 2, single buffered']
    #allocation5 [shape = 's32[1]{0}', space=sflag, size = 0x4, scoped, tag = 'scoped memory for linear_classifier.1']
    %8 = vsyncpa [#allocation3], 0
    %9 = vsyncpa [#allocation5], 0
    // Predicated region
    $region2: #{linear_classifier.1} parent=1 // pred_check
      _
    $region3: #{linear_classifier.1} parent=1 // pred_check_branch
      %11 = sbr.rel (0) target = $region5
    $region4: #{linear_classifier.1} parent=1 // pred_region
      _
    $region5: #{linear_classifier.1} parent=1 // pred_fallthru
      _
    // Predicated region
    $region6: #{linear_classifier.1} parent=1 // pred_check
      _
    $region7: #{linear_classifier.1} parent=1 // pred_check_branch
      %13 = sbr.rel (0) target = $region9
    $region8: #{linear_classifier.1} parent=1 // pred_region
      %s15 = ssub.s32 65536, 65536
      %16 = vsyncadd [#allocation3], %s15
      %s17 = sshll.u32 [#allocation2], 4
      %s18 = int_to_ptr.vmem [resolvable:$true] %s17
      %23 = dma.hbm_to_vmem [thread:$0]  %s1, 65536, %s18, [#allocation3], 512, 512, 32
    $region9: #{linear_classifier.1} parent=1 // pred_fallthru
      _
    // Predicated region
    $region10: #{linear_classifier.1} parent=1 // pred_check
      _
    $region11: #{linear_classifier.1} parent=1 // pred_check_branch
      %25 = sbr.rel (0) target = $region13
    $region12: #{linear_classifier.1} parent=1 // pred_region
      %s27 = ssub.s32 128, 128
      %28 = vsyncadd [#allocation5], %s27
      %s30 = sshll.u32 [#allocation4], 4
      %s31 = int_to_ptr.vmem [resolvable:$true] %s30
      %33 = dma.hbm_to_vmem [thread:$0]  %s2, 128, %s31, [#allocation5]
    $region13: #{linear_classifier.1} parent=1 // pred_fallthru
      _
    // Predicated region
    $region14: #{linear_classifier.1} parent=1 // pred_check
      _
    $region15: #{linear_classifier.1} parent=1 // pred_check_branch
      %35 = sbr.rel (0) target = $region17
    $region16: #{linear_classifier.1} parent=1 // pred_region
      %36 = dma.done [#allocation3], 65536
    $region17: #{linear_classifier.1} parent=1 // pred_fallthru
      _
    // Predicated region
    $region18: #{linear_classifier.1} parent=1 // pred_check
      _
    $region19: #{linear_classifier.1} parent=1 // pred_check_branch
      %38 = sbr.rel (0) target = $region21
    $region20: #{linear_classifier.1} parent=1 // pred_region
      %39 = dma.done [#allocation5], 128
    $region21: #{linear_classifier.1} parent=1 // pred_fallthru
      _
    %v40 = vld [vmem:[%s0] sm:$0xff]
    %v41 = vld [vmem:[%s0 + $0x8] sm:$0xff]
    %v42 = vld [vmem:[%s0 + $0x10] sm:$0xff]
    %v43 = vld [vmem:[%s0 + $0x18] sm:$0xff]
    %v44 = vld [vmem:[#allocation2] sm:$0xff]
    %v45 = vld [vmem:[#allocation2 + $0x8] sm:$0xff]
    %v46 = vld [vmem:[#allocation2 + $0x10] sm:$0xff]
    %v47 = vld [vmem:[#allocation2 + $0x18] sm:$0xff]
    %v48 = vld [vmem:[#allocation2 + $0x20] sm:$0xff]
    %v49 = vld [vmem:[#allocation2 + $0x28] sm:$0xff]
    %v50 = vld [vmem:[#allocation2 + $0x30] sm:$0xff]
    %v51 = vld [vmem:[#allocation2 + $0x38] sm:$0xff]
    %v52 = vld [vmem:[#allocation2 + $0x40] sm:$0xff]
    %v53 = vld [vmem:[#allocation2 + $0x48] sm:$0xff]
    %v54 = vld [vmem:[#allocation2 + $0x50] sm:$0xff]
    %v55 = vld [vmem:[#allocation2 + $0x58] sm:$0xff]
    %v56 = vld [vmem:[#allocation2 + $0x60] sm:$0xff]
    %v57 = vld [vmem:[#allocation2 + $0x68] sm:$0xff]
    %v58 = vld [vmem:[#allocation2 + $0x70] sm:$0xff]
    %v59 = vld [vmem:[#allocation2 + $0x78] sm:$0xff]
    %v60 = vld [vmem:[#allocation2 + $0x80] sm:$0xff]
    %v61 = vld [vmem:[#allocation2 + $0x88] sm:$0xff]
    %v62 = vld [vmem:[#allocation2 + $0x90] sm:$0xff]
    %v63 = vld [vmem:[#allocation2 + $0x98] sm:$0xff]
    %v64 = vld [vmem:[#allocation2 + $0xa0] sm:$0xff]
    %v65 = vld [vmem:[#allocation2 + $0xa8] sm:$0xff]
    %v66 = vld [vmem:[#allocation2 + $0xb0] sm:$0xff]
    %v67 = vld [vmem:[#allocation2 + $0xb8] sm:$0xff]
    %v68 = vld [vmem:[#allocation2 + $0xc0] sm:$0xff]
    %v69 = vld [vmem:[#allocation2 + $0xc8] sm:$0xff]
    %v70 = vld [vmem:[#allocation2 + $0xd0] sm:$0xff]
    %v71 = vld [vmem:[#allocation2 + $0xd8] sm:$0xff]
    %v72 = vld [vmem:[#allocation2 + $0xe0] sm:$0xff]
    %v73 = vld [vmem:[#allocation2 + $0xe8] sm:$0xff]
    %v74 = vld [vmem:[#allocation2 + $0xf0] sm:$0xff]
    %v75 = vld [vmem:[#allocation2 + $0xf8] sm:$0xff]
    %v76 = vld [vmem:[#allocation2 + $0x100] sm:$0xff]
    %v77 = vld [vmem:[#allocation2 + $0x108] sm:$0xff]
    %v78 = vld [vmem:[#allocation2 + $0x110] sm:$0xff]
    %v79 = vld [vmem:[#allocation2 + $0x118] sm:$0xff]
    %v80 = vld [vmem:[#allocation2 + $0x120] sm:$0xff]
    %v81 = vld [vmem:[#allocation2 + $0x128] sm:$0xff]
    %v82 = vld [vmem:[#allocation2 + $0x130] sm:$0xff]
    %v83 = vld [vmem:[#allocation2 + $0x138] sm:$0xff]
    %v84 = vld [vmem:[#allocation2 + $0x140] sm:$0xff]
    %v85 = vld [vmem:[#allocation2 + $0x148] sm:$0xff]
    %v86 = vld [vmem:[#allocation2 + $0x150] sm:$0xff]
    %v87 = vld [vmem:[#allocation2 + $0x158] sm:$0xff]
    %v88 = vld [vmem:[#allocation2 + $0x160] sm:$0xff]
    %v89 = vld [vmem:[#allocation2 + $0x168] sm:$0xff]
    %v90 = vld [vmem:[#allocation2 + $0x170] sm:$0xff]
    %v91 = vld [vmem:[#allocation2 + $0x178] sm:$0xff]
    %v92 = vld [vmem:[#allocation2 + $0x180] sm:$0xff]
    %v93 = vld [vmem:[#allocation2 + $0x188] sm:$0xff]
    %v94 = vld [vmem:[#allocation2 + $0x190] sm:$0xff]
    %v95 = vld [vmem:[#allocation2 + $0x198] sm:$0xff]
    %v96 = vld [vmem:[#allocation2 + $0x1a0] sm:$0xff]
    %v97 = vld [vmem:[#allocation2 + $0x1a8] sm:$0xff]
    %v98 = vld [vmem:[#allocation2 + $0x1b0] sm:$0xff]
    %v99 = vld [vmem:[#allocation2 + $0x1b8] sm:$0xff]
    %v100 = vld [vmem:[#allocation2 + $0x1c0] sm:$0xff]
    %v101 = vld [vmem:[#allocation2 + $0x1c8] sm:$0xff]
    %v102 = vld [vmem:[#allocation2 + $0x1d0] sm:$0xff]
    %v103 = vld [vmem:[#allocation2 + $0x1d8] sm:$0xff]
    %v104 = vld [vmem:[#allocation2 + $0x1e0] sm:$0xff]
    %v105 = vld [vmem:[#allocation2 + $0x1e8] sm:$0xff]
    %v106 = vld [vmem:[#allocation2 + $0x1f0] sm:$0xff]
    %v107 = vld [vmem:[#allocation2 + $0x1f8] sm:$0xff]
    %v108 = vld [vmem:[#allocation2 + $0x200] sm:$0xff]
    %v109 = vld [vmem:[#allocation2 + $0x208] sm:$0xff]
    %v110 = vld [vmem:[#allocation2 + $0x210] sm:$0xff]
    %v111 = vld [vmem:[#allocation2 + $0x218] sm:$0xff]
    %v112 = vld [vmem:[#allocation2 + $0x220] sm:$0xff]
    %v113 = vld [vmem:[#allocation2 + $0x228] sm:$0xff]
    %v114 = vld [vmem:[#allocation2 + $0x230] sm:$0xff]
    %v115 = vld [vmem:[#allocation2 + $0x238] sm:$0xff]
    %v116 = vld [vmem:[#allocation2 + $0x240] sm:$0xff]
    %v117 = vld [vmem:[#allocation2 + $0x248] sm:$0xff]
    %v118 = vld [vmem:[#allocation2 + $0x250] sm:$0xff]
    %v119 = vld [vmem:[#allocation2 + $0x258] sm:$0xff]
    %v120 = vld [vmem:[#allocation2 + $0x260] sm:$0xff]
    %v121 = vld [vmem:[#allocation2 + $0x268] sm:$0xff]
    %v122 = vld [vmem:[#allocation2 + $0x270] sm:$0xff]
    %v123 = vld [vmem:[#allocation2 + $0x278] sm:$0xff]
    %v124 = vld [vmem:[#allocation2 + $0x280] sm:$0xff]
    %v125 = vld [vmem:[#allocation2 + $0x288] sm:$0xff]
    %v126 = vld [vmem:[#allocation2 + $0x290] sm:$0xff]
    %v127 = vld [vmem:[#allocation2 + $0x298] sm:$0xff]
    %v128 = vld [vmem:[#allocation2 + $0x2a0] sm:$0xff]
    %v129 = vld [vmem:[#allocation2 + $0x2a8] sm:$0xff]
    %v130 = vld [vmem:[#allocation2 + $0x2b0] sm:$0xff]
    %v131 = vld [vmem:[#allocation2 + $0x2b8] sm:$0xff]
    %v132 = vld [vmem:[#allocation2 + $0x2c0] sm:$0xff]
    %v133 = vld [vmem:[#allocation2 + $0x2c8] sm:$0xff]
    %v134 = vld [vmem:[#allocation2 + $0x2d0] sm:$0xff]
    %v135 = vld [vmem:[#allocation2 + $0x2d8] sm:$0xff]
    %v136 = vld [vmem:[#allocation2 + $0x2e0] sm:$0xff]
    %v137 = vld [vmem:[#allocation2 + $0x2e8] sm:$0xff]
    %v138 = vld [vmem:[#allocation2 + $0x2f0] sm:$0xff]
    %v139 = vld [vmem:[#allocation2 + $0x2f8] sm:$0xff]
    %v140 = vld [vmem:[#allocation2 + $0x300] sm:$0xff]
    %v141 = vld [vmem:[#allocation2 + $0x308] sm:$0xff]
    %v142 = vld [vmem:[#allocation2 + $0x310] sm:$0xff]
    %v143 = vld [vmem:[#allocation2 + $0x318] sm:$0xff]
    %v144 = vld [vmem:[#allocation2 + $0x320] sm:$0xff]
    %v145 = vld [vmem:[#allocation2 + $0x328] sm:$0xff]
    %v146 = vld [vmem:[#allocation2 + $0x330] sm:$0xff]
    %v147 = vld [vmem:[#allocation2 + $0x338] sm:$0xff]
    %v148 = vld [vmem:[#allocation2 + $0x340] sm:$0xff]
    %v149 = vld [vmem:[#allocation2 + $0x348] sm:$0xff]
    %v150 = vld [vmem:[#allocation2 + $0x350] sm:$0xff]
    %v151 = vld [vmem:[#allocation2 + $0x358] sm:$0xff]
    %v152 = vld [vmem:[#allocation2 + $0x360] sm:$0xff]
    %v153 = vld [vmem:[#allocation2 + $0x368] sm:$0xff]
    %v154 = vld [vmem:[#allocation2 + $0x370] sm:$0xff]
    %v155 = vld [vmem:[#allocation2 + $0x378] sm:$0xff]
    %v156 = vld [vmem:[#allocation2 + $0x380] sm:$0xff]
    %v157 = vld [vmem:[#allocation2 + $0x388] sm:$0xff]
    %v158 = vld [vmem:[#allocation2 + $0x390] sm:$0xff]
    %v159 = vld [vmem:[#allocation2 + $0x398] sm:$0xff]
    %v160 = vld [vmem:[#allocation2 + $0x3a0] sm:$0xff]
    %v161 = vld [vmem:[#allocation2 + $0x3a8] sm:$0xff]
    %v162 = vld [vmem:[#allocation2 + $0x3b0] sm:$0xff]
    %v163 = vld [vmem:[#allocation2 + $0x3b8] sm:$0xff]
    %v164 = vld [vmem:[#allocation2 + $0x3c0] sm:$0xff]
    %v165 = vld [vmem:[#allocation2 + $0x3c8] sm:$0xff]
    %v166 = vld [vmem:[#allocation2 + $0x3d0] sm:$0xff]
    %v167 = vld [vmem:[#allocation2 + $0x3d8] sm:$0xff]
    %v168 = vld [vmem:[#allocation2 + $0x3e0] sm:$0xff]
    %v169 = vld [vmem:[#allocation2 + $0x3e8] sm:$0xff]
    %v170 = vld [vmem:[#allocation2 + $0x3f0] sm:$0xff]
    %v171 = vld [vmem:[#allocation2 + $0x3f8] sm:$0xff]
    %v172 = vld [vmem:[#allocation2 + $0x400] sm:$0xff]
    %v173 = vld [vmem:[#allocation2 + $0x408] sm:$0xff]
    %v174 = vld [vmem:[#allocation2 + $0x410] sm:$0xff]
    %v175 = vld [vmem:[#allocation2 + $0x418] sm:$0xff]
    %v176 = vld [vmem:[#allocation2 + $0x420] sm:$0xff]
    %v177 = vld [vmem:[#allocation2 + $0x428] sm:$0xff]
    %v178 = vld [vmem:[#allocation2 + $0x430] sm:$0xff]
    %v179 = vld [vmem:[#allocation2 + $0x438] sm:$0xff]
    %v180 = vld [vmem:[#allocation2 + $0x440] sm:$0xff]
    %v181 = vld [vmem:[#allocation2 + $0x448] sm:$0xff]
    %v182 = vld [vmem:[#allocation2 + $0x450] sm:$0xff]
    %v183 = vld [vmem:[#allocation2 + $0x458] sm:$0xff]
    %v184 = vld [vmem:[#allocation2 + $0x460] sm:$0xff]
    %v185 = vld [vmem:[#allocation2 + $0x468] sm:$0xff]
    %v186 = vld [vmem:[#allocation2 + $0x470] sm:$0xff]
    %v187 = vld [vmem:[#allocation2 + $0x478] sm:$0xff]
    %v188 = vld [vmem:[#allocation2 + $0x480] sm:$0xff]
    %v189 = vld [vmem:[#allocation2 + $0x488] sm:$0xff]
    %v190 = vld [vmem:[#allocation2 + $0x490] sm:$0xff]
    %v191 = vld [vmem:[#allocation2 + $0x498] sm:$0xff]
    %v192 = vld [vmem:[#allocation2 + $0x4a0] sm:$0xff]
    %v193 = vld [vmem:[#allocation2 + $0x4a8] sm:$0xff]
    %v194 = vld [vmem:[#allocation2 + $0x4b0] sm:$0xff]
    %v195 = vld [vmem:[#allocation2 + $0x4b8] sm:$0xff]
    %v196 = vld [vmem:[#allocation2 + $0x4c0] sm:$0xff]
    %v197 = vld [vmem:[#allocation2 + $0x4c8] sm:$0xff]
    %v198 = vld [vmem:[#allocation2 + $0x4d0] sm:$0xff]
    %v199 = vld [vmem:[#allocation2 + $0x4d8] sm:$0xff]
    %v200 = vld [vmem:[#allocation2 + $0x4e0] sm:$0xff]
    %v201 = vld [vmem:[#allocation2 + $0x4e8] sm:$0xff]
    %v202 = vld [vmem:[#allocation2 + $0x4f0] sm:$0xff]
    %v203 = vld [vmem:[#allocation2 + $0x4f8] sm:$0xff]
    %v204 = vld [vmem:[#allocation2 + $0x500] sm:$0xff]
    %v205 = vld [vmem:[#allocation2 + $0x508] sm:$0xff]
    %v206 = vld [vmem:[#allocation2 + $0x510] sm:$0xff]
    %v207 = vld [vmem:[#allocation2 + $0x518] sm:$0xff]
    %v208 = vld [vmem:[#allocation2 + $0x520] sm:$0xff]
    %v209 = vld [vmem:[#allocation2 + $0x528] sm:$0xff]
    %v210 = vld [vmem:[#allocation2 + $0x530] sm:$0xff]
    %v211 = vld [vmem:[#allocation2 + $0x538] sm:$0xff]
    %v212 = vld [vmem:[#allocation2 + $0x540] sm:$0xff]
    %v213 = vld [vmem:[#allocation2 + $0x548] sm:$0xff]
    %v214 = vld [vmem:[#allocation2 + $0x550] sm:$0xff]
    %v215 = vld [vmem:[#allocation2 + $0x558] sm:$0xff]
    %v216 = vld [vmem:[#allocation2 + $0x560] sm:$0xff]
    %v217 = vld [vmem:[#allocation2 + $0x568] sm:$0xff]
    %v218 = vld [vmem:[#allocation2 + $0x570] sm:$0xff]
    %v219 = vld [vmem:[#allocation2 + $0x578] sm:$0xff]
    %v220 = vld [vmem:[#allocation2 + $0x580] sm:$0xff]
    %v221 = vld [vmem:[#allocation2 + $0x588] sm:$0xff]
    %v222 = vld [vmem:[#allocation2 + $0x590] sm:$0xff]
    %v223 = vld [vmem:[#allocation2 + $0x598] sm:$0xff]
    %v224 = vld [vmem:[#allocation2 + $0x5a0] sm:$0xff]
    %v225 = vld [vmem:[#allocation2 + $0x5a8] sm:$0xff]
    %v226 = vld [vmem:[#allocation2 + $0x5b0] sm:$0xff]
    %v227 = vld [vmem:[#allocation2 + $0x5b8] sm:$0xff]
    %v228 = vld [vmem:[#allocation2 + $0x5c0] sm:$0xff]
    %v229 = vld [vmem:[#allocation2 + $0x5c8] sm:$0xff]
    %v230 = vld [vmem:[#allocation2 + $0x5d0] sm:$0xff]
    %v231 = vld [vmem:[#allocation2 + $0x5d8] sm:$0xff]
    %v232 = vld [vmem:[#allocation2 + $0x5e0] sm:$0xff]
    %v233 = vld [vmem:[#allocation2 + $0x5e8] sm:$0xff]
    %v234 = vld [vmem:[#allocation2 + $0x5f0] sm:$0xff]
    %v235 = vld [vmem:[#allocation2 + $0x5f8] sm:$0xff]
    %v236 = vld [vmem:[#allocation2 + $0x600] sm:$0xff]
    %v237 = vld [vmem:[#allocation2 + $0x608] sm:$0xff]
    %v238 = vld [vmem:[#allocation2 + $0x610] sm:$0xff]
    %v239 = vld [vmem:[#allocation2 + $0x618] sm:$0xff]
    %v240 = vld [vmem:[#allocation2 + $0x620] sm:$0xff]
    %v241 = vld [vmem:[#allocation2 + $0x628] sm:$0xff]
    %v242 = vld [vmem:[#allocation2 + $0x630] sm:$0xff]
    %v243 = vld [vmem:[#allocation2 + $0x638] sm:$0xff]
    %v244 = vld [vmem:[#allocation2 + $0x640] sm:$0xff]
    %v245 = vld [vmem:[#allocation2 + $0x648] sm:$0xff]
    %v246 = vld [vmem:[#allocation2 + $0x650] sm:$0xff]
    %v247 = vld [vmem:[#allocation2 + $0x658] sm:$0xff]
    %v248 = vld [vmem:[#allocation2 + $0x660] sm:$0xff]
    %v249 = vld [vmem:[#allocation2 + $0x668] sm:$0xff]
    %v250 = vld [vmem:[#allocation2 + $0x670] sm:$0xff]
    %v251 = vld [vmem:[#allocation2 + $0x678] sm:$0xff]
    %v252 = vld [vmem:[#allocation2 + $0x680] sm:$0xff]
    %v253 = vld [vmem:[#allocation2 + $0x688] sm:$0xff]
    %v254 = vld [vmem:[#allocation2 + $0x690] sm:$0xff]
    %v255 = vld [vmem:[#allocation2 + $0x698] sm:$0xff]
    %v256 = vld [vmem:[#allocation2 + $0x6a0] sm:$0xff]
    %v257 = vld [vmem:[#allocation2 + $0x6a8] sm:$0xff]
    %v258 = vld [vmem:[#allocation2 + $0x6b0] sm:$0xff]
    %v259 = vld [vmem:[#allocation2 + $0x6b8] sm:$0xff]
    %v260 = vld [vmem:[#allocation2 + $0x6c0] sm:$0xff]
    %v261 = vld [vmem:[#allocation2 + $0x6c8] sm:$0xff]
    %v262 = vld [vmem:[#allocation2 + $0x6d0] sm:$0xff]
    %v263 = vld [vmem:[#allocation2 + $0x6d8] sm:$0xff]
    %v264 = vld [vmem:[#allocation2 + $0x6e0] sm:$0xff]
    %v265 = vld [vmem:[#allocation2 + $0x6e8] sm:$0xff]
    %v266 = vld [vmem:[#allocation2 + $0x6f0] sm:$0xff]
    %v267 = vld [vmem:[#allocation2 + $0x6f8] sm:$0xff]
    %v268 = vld [vmem:[#allocation2 + $0x700] sm:$0xff]
    %v269 = vld [vmem:[#allocation2 + $0x708] sm:$0xff]
    %v270 = vld [vmem:[#allocation2 + $0x710] sm:$0xff]
    %v271 = vld [vmem:[#allocation2 + $0x718] sm:$0xff]
    %v272 = vld [vmem:[#allocation2 + $0x720] sm:$0xff]
    %v273 = vld [vmem:[#allocation2 + $0x728] sm:$0xff]
    %v274 = vld [vmem:[#allocation2 + $0x730] sm:$0xff]
    %v275 = vld [vmem:[#allocation2 + $0x738] sm:$0xff]
    %v276 = vld [vmem:[#allocation2 + $0x740] sm:$0xff]
    %v277 = vld [vmem:[#allocation2 + $0x748] sm:$0xff]
    %v278 = vld [vmem:[#allocation2 + $0x750] sm:$0xff]
    %v279 = vld [vmem:[#allocation2 + $0x758] sm:$0xff]
    %v280 = vld [vmem:[#allocation2 + $0x760] sm:$0xff]
    %v281 = vld [vmem:[#allocation2 + $0x768] sm:$0xff]
    %v282 = vld [vmem:[#allocation2 + $0x770] sm:$0xff]
    %v283 = vld [vmem:[#allocation2 + $0x778] sm:$0xff]
    %v284 = vld [vmem:[#allocation2 + $0x780] sm:$0xff]
    %v285 = vld [vmem:[#allocation2 + $0x788] sm:$0xff]
    %v286 = vld [vmem:[#allocation2 + $0x790] sm:$0xff]
    %v287 = vld [vmem:[#allocation2 + $0x798] sm:$0xff]
    %v288 = vld [vmem:[#allocation2 + $0x7a0] sm:$0xff]
    %v289 = vld [vmem:[#allocation2 + $0x7a8] sm:$0xff]
    %v290 = vld [vmem:[#allocation2 + $0x7b0] sm:$0xff]
    %v291 = vld [vmem:[#allocation2 + $0x7b8] sm:$0xff]
    %v292 = vld [vmem:[#allocation2 + $0x7c0] sm:$0xff]
    %v293 = vld [vmem:[#allocation2 + $0x7c8] sm:$0xff]
    %v294 = vld [vmem:[#allocation2 + $0x7d0] sm:$0xff]
    %v295 = vld [vmem:[#allocation2 + $0x7d8] sm:$0xff]
    %v296 = vld [vmem:[#allocation2 + $0x7e0] sm:$0xff]
    %v297 = vld [vmem:[#allocation2 + $0x7e8] sm:$0xff]
    %v298 = vld [vmem:[#allocation2 + $0x7f0] sm:$0xff]
    %v299 = vld [vmem:[#allocation2 + $0x7f8] sm:$0xff]
    %v300 = vld [vmem:[#allocation2 + $0x800] sm:$0xff]
    %v301 = vld [vmem:[#allocation2 + $0x808] sm:$0xff]
    %v302 = vld [vmem:[#allocation2 + $0x810] sm:$0xff]
    %v303 = vld [vmem:[#allocation2 + $0x818] sm:$0xff]
    %v304 = vld [vmem:[#allocation2 + $0x820] sm:$0xff]
    %v305 = vld [vmem:[#allocation2 + $0x828] sm:$0xff]
    %v306 = vld [vmem:[#allocation2 + $0x830] sm:$0xff]
    %v307 = vld [vmem:[#allocation2 + $0x838] sm:$0xff]
    %v308 = vld [vmem:[#allocation2 + $0x840] sm:$0xff]
    %v309 = vld [vmem:[#allocation2 + $0x848] sm:$0xff]
    %v310 = vld [vmem:[#allocation2 + $0x850] sm:$0xff]
    %v311 = vld [vmem:[#allocation2 + $0x858] sm:$0xff]
    %v312 = vld [vmem:[#allocation2 + $0x860] sm:$0xff]
    %v313 = vld [vmem:[#allocation2 + $0x868] sm:$0xff]
    %v314 = vld [vmem:[#allocation2 + $0x870] sm:$0xff]
    %v315 = vld [vmem:[#allocation2 + $0x878] sm:$0xff]
    %v316 = vld [vmem:[#allocation2 + $0x880] sm:$0xff]
    %v317 = vld [vmem:[#allocation2 + $0x888] sm:$0xff]
    %v318 = vld [vmem:[#allocation2 + $0x890] sm:$0xff]
    %v319 = vld [vmem:[#allocation2 + $0x898] sm:$0xff]
    %v320 = vld [vmem:[#allocation2 + $0x8a0] sm:$0xff]
    %v321 = vld [vmem:[#allocation2 + $0x8a8] sm:$0xff]
    %v322 = vld [vmem:[#allocation2 + $0x8b0] sm:$0xff]
    %v323 = vld [vmem:[#allocation2 + $0x8b8] sm:$0xff]
    %v324 = vld [vmem:[#allocation2 + $0x8c0] sm:$0xff]
    %v325 = vld [vmem:[#allocation2 + $0x8c8] sm:$0xff]
    %v326 = vld [vmem:[#allocation2 + $0x8d0] sm:$0xff]
    %v327 = vld [vmem:[#allocation2 + $0x8d8] sm:$0xff]
    %v328 = vld [vmem:[#allocation2 + $0x8e0] sm:$0xff]
    %v329 = vld [vmem:[#allocation2 + $0x8e8] sm:$0xff]
    %v330 = vld [vmem:[#allocation2 + $0x8f0] sm:$0xff]
    %v331 = vld [vmem:[#allocation2 + $0x8f8] sm:$0xff]
    %v332 = vld [vmem:[#allocation2 + $0x900] sm:$0xff]
    %v333 = vld [vmem:[#allocation2 + $0x908] sm:$0xff]
    %v334 = vld [vmem:[#allocation2 + $0x910] sm:$0xff]
    %v335 = vld [vmem:[#allocation2 + $0x918] sm:$0xff]
    %v336 = vld [vmem:[#allocation2 + $0x920] sm:$0xff]
    %v337 = vld [vmem:[#allocation2 + $0x928] sm:$0xff]
    %v338 = vld [vmem:[#allocation2 + $0x930] sm:$0xff]
    %v339 = vld [vmem:[#allocation2 + $0x938] sm:$0xff]
    %v340 = vld [vmem:[#allocation2 + $0x940] sm:$0xff]
    %v341 = vld [vmem:[#allocation2 + $0x948] sm:$0xff]
    %v342 = vld [vmem:[#allocation2 + $0x950] sm:$0xff]
    %v343 = vld [vmem:[#allocation2 + $0x958] sm:$0xff]
    %v344 = vld [vmem:[#allocation2 + $0x960] sm:$0xff]
    %v345 = vld [vmem:[#allocation2 + $0x968] sm:$0xff]
    %v346 = vld [vmem:[#allocation2 + $0x970] sm:$0xff]
    %v347 = vld [vmem:[#allocation2 + $0x978] sm:$0xff]
    %v348 = vld [vmem:[#allocation2 + $0x980] sm:$0xff]
    %v349 = vld [vmem:[#allocation2 + $0x988] sm:$0xff]
    %v350 = vld [vmem:[#allocation2 + $0x990] sm:$0xff]
    %v351 = vld [vmem:[#allocation2 + $0x998] sm:$0xff]
    %v352 = vld [vmem:[#allocation2 + $0x9a0] sm:$0xff]
    %v353 = vld [vmem:[#allocation2 + $0x9a8] sm:$0xff]
    %v354 = vld [vmem:[#allocation2 + $0x9b0] sm:$0xff]
    %v355 = vld [vmem:[#allocation2 + $0x9b8] sm:$0xff]
    %v356 = vld [vmem:[#allocation2 + $0x9c0] sm:$0xff]
    %v357 = vld [vmem:[#allocation2 + $0x9c8] sm:$0xff]
    %v358 = vld [vmem:[#allocation2 + $0x9d0] sm:$0xff]
    %v359 = vld [vmem:[#allocation2 + $0x9d8] sm:$0xff]
    %v360 = vld [vmem:[#allocation2 + $0x9e0] sm:$0xff]
    %v361 = vld [vmem:[#allocation2 + $0x9e8] sm:$0xff]
    %v362 = vld [vmem:[#allocation2 + $0x9f0] sm:$0xff]
    %v363 = vld [vmem:[#allocation2 + $0x9f8] sm:$0xff]
    %v364 = vld [vmem:[#allocation2 + $0xa00] sm:$0xff]
    %v365 = vld [vmem:[#allocation2 + $0xa08] sm:$0xff]
    %v366 = vld [vmem:[#allocation2 + $0xa10] sm:$0xff]
    %v367 = vld [vmem:[#allocation2 + $0xa18] sm:$0xff]
    %v368 = vld [vmem:[#allocation2 + $0xa20] sm:$0xff]
    %v369 = vld [vmem:[#allocation2 + $0xa28] sm:$0xff]
    %v370 = vld [vmem:[#allocation2 + $0xa30] sm:$0xff]
    %v371 = vld [vmem:[#allocation2 + $0xa38] sm:$0xff]
    %v372 = vld [vmem:[#allocation2 + $0xa40] sm:$0xff]
    %v373 = vld [vmem:[#allocation2 + $0xa48] sm:$0xff]
    %v374 = vld [vmem:[#allocation2 + $0xa50] sm:$0xff]
    %v375 = vld [vmem:[#allocation2 + $0xa58] sm:$0xff]
    %v376 = vld [vmem:[#allocation2 + $0xa60] sm:$0xff]
    %v377 = vld [vmem:[#allocation2 + $0xa68] sm:$0xff]
    %v378 = vld [vmem:[#allocation2 + $0xa70] sm:$0xff]
    %v379 = vld [vmem:[#allocation2 + $0xa78] sm:$0xff]
    %v380 = vld [vmem:[#allocation2 + $0xa80] sm:$0xff]
    %v381 = vld [vmem:[#allocation2 + $0xa88] sm:$0xff]
    %v382 = vld [vmem:[#allocation2 + $0xa90] sm:$0xff]
    %v383 = vld [vmem:[#allocation2 + $0xa98] sm:$0xff]
    %v384 = vld [vmem:[#allocation2 + $0xaa0] sm:$0xff]
    %v385 = vld [vmem:[#allocation2 + $0xaa8] sm:$0xff]
    %v386 = vld [vmem:[#allocation2 + $0xab0] sm:$0xff]
    %v387 = vld [vmem:[#allocation2 + $0xab8] sm:$0xff]
    %v388 = vld [vmem:[#allocation2 + $0xac0] sm:$0xff]
    %v389 = vld [vmem:[#allocation2 + $0xac8] sm:$0xff]
    %v390 = vld [vmem:[#allocation2 + $0xad0] sm:$0xff]
    %v391 = vld [vmem:[#allocation2 + $0xad8] sm:$0xff]
    %v392 = vld [vmem:[#allocation2 + $0xae0] sm:$0xff]
    %v393 = vld [vmem:[#allocation2 + $0xae8] sm:$0xff]
    %v394 = vld [vmem:[#allocation2 + $0xaf0] sm:$0xff]
    %v395 = vld [vmem:[#allocation2 + $0xaf8] sm:$0xff]
    %v396 = vld [vmem:[#allocation2 + $0xb00] sm:$0xff]
    %v397 = vld [vmem:[#allocation2 + $0xb08] sm:$0xff]
    %v398 = vld [vmem:[#allocation2 + $0xb10] sm:$0xff]
    %v399 = vld [vmem:[#allocation2 + $0xb18] sm:$0xff]
    %v400 = vld [vmem:[#allocation2 + $0xb20] sm:$0xff]
    %v401 = vld [vmem:[#allocation2 + $0xb28] sm:$0xff]
    %v402 = vld [vmem:[#allocation2 + $0xb30] sm:$0xff]
    %v403 = vld [vmem:[#allocation2 + $0xb38] sm:$0xff]
    %v404 = vld [vmem:[#allocation2 + $0xb40] sm:$0xff]
    %v405 = vld [vmem:[#allocation2 + $0xb48] sm:$0xff]
    %v406 = vld [vmem:[#allocation2 + $0xb50] sm:$0xff]
    %v407 = vld [vmem:[#allocation2 + $0xb58] sm:$0xff]
    %v408 = vld [vmem:[#allocation2 + $0xb60] sm:$0xff]
    %v409 = vld [vmem:[#allocation2 + $0xb68] sm:$0xff]
    %v410 = vld [vmem:[#allocation2 + $0xb70] sm:$0xff]
    %v411 = vld [vmem:[#allocation2 + $0xb78] sm:$0xff]
    %v412 = vld [vmem:[#allocation2 + $0xb80] sm:$0xff]
    %v413 = vld [vmem:[#allocation2 + $0xb88] sm:$0xff]
    %v414 = vld [vmem:[#allocation2 + $0xb90] sm:$0xff]
    %v415 = vld [vmem:[#allocation2 + $0xb98] sm:$0xff]
    %v416 = vld [vmem:[#allocation2 + $0xba0] sm:$0xff]
    %v417 = vld [vmem:[#allocation2 + $0xba8] sm:$0xff]
    %v418 = vld [vmem:[#allocation2 + $0xbb0] sm:$0xff]
    %v419 = vld [vmem:[#allocation2 + $0xbb8] sm:$0xff]
    %v420 = vld [vmem:[#allocation2 + $0xbc0] sm:$0xff]
    %v421 = vld [vmem:[#allocation2 + $0xbc8] sm:$0xff]
    %v422 = vld [vmem:[#allocation2 + $0xbd0] sm:$0xff]
    %v423 = vld [vmem:[#allocation2 + $0xbd8] sm:$0xff]
    %v424 = vld [vmem:[#allocation2 + $0xbe0] sm:$0xff]
    %v425 = vld [vmem:[#allocation2 + $0xbe8] sm:$0xff]
    %v426 = vld [vmem:[#allocation2 + $0xbf0] sm:$0xff]
    %v427 = vld [vmem:[#allocation2 + $0xbf8] sm:$0xff]
    %v428 = vld [vmem:[#allocation2 + $0xc00] sm:$0xff]
    %v429 = vld [vmem:[#allocation2 + $0xc08] sm:$0xff]
    %v430 = vld [vmem:[#allocation2 + $0xc10] sm:$0xff]
    %v431 = vld [vmem:[#allocation2 + $0xc18] sm:$0xff]
    %v432 = vld [vmem:[#allocation2 + $0xc20] sm:$0xff]
    %v433 = vld [vmem:[#allocation2 + $0xc28] sm:$0xff]
    %v434 = vld [vmem:[#allocation2 + $0xc30] sm:$0xff]
    %v435 = vld [vmem:[#allocation2 + $0xc38] sm:$0xff]
    %v436 = vld [vmem:[#allocation2 + $0xc40] sm:$0xff]
    %v437 = vld [vmem:[#allocation2 + $0xc48] sm:$0xff]
    %v438 = vld [vmem:[#allocation2 + $0xc50] sm:$0xff]
    %v439 = vld [vmem:[#allocation2 + $0xc58] sm:$0xff]
    %v440 = vld [vmem:[#allocation2 + $0xc60] sm:$0xff]
    %v441 = vld [vmem:[#allocation2 + $0xc68] sm:$0xff]
    %v442 = vld [vmem:[#allocation2 + $0xc70] sm:$0xff]
    %v443 = vld [vmem:[#allocation2 + $0xc78] sm:$0xff]
    %v444 = vld [vmem:[#allocation2 + $0xc80] sm:$0xff]
    %v445 = vld [vmem:[#allocation2 + $0xc88] sm:$0xff]
    %v446 = vld [vmem:[#allocation2 + $0xc90] sm:$0xff]
    %v447 = vld [vmem:[#allocation2 + $0xc98] sm:$0xff]
    %v448 = vld [vmem:[#allocation2 + $0xca0] sm:$0xff]
    %v449 = vld [vmem:[#allocation2 + $0xca8] sm:$0xff]
    %v450 = vld [vmem:[#allocation2 + $0xcb0] sm:$0xff]
    %v451 = vld [vmem:[#allocation2 + $0xcb8] sm:$0xff]
    %v452 = vld [vmem:[#allocation2 + $0xcc0] sm:$0xff]
    %v453 = vld [vmem:[#allocation2 + $0xcc8] sm:$0xff]
    %v454 = vld [vmem:[#allocation2 + $0xcd0] sm:$0xff]
    %v455 = vld [vmem:[#allocation2 + $0xcd8] sm:$0xff]
    %v456 = vld [vmem:[#allocation2 + $0xce0] sm:$0xff]
    %v457 = vld [vmem:[#allocation2 + $0xce8] sm:$0xff]
    %v458 = vld [vmem:[#allocation2 + $0xcf0] sm:$0xff]
    %v459 = vld [vmem:[#allocation2 + $0xcf8] sm:$0xff]
    %v460 = vld [vmem:[#allocation2 + $0xd00] sm:$0xff]
    %v461 = vld [vmem:[#allocation2 + $0xd08] sm:$0xff]
    %v462 = vld [vmem:[#allocation2 + $0xd10] sm:$0xff]
    %v463 = vld [vmem:[#allocation2 + $0xd18] sm:$0xff]
    %v464 = vld [vmem:[#allocation2 + $0xd20] sm:$0xff]
    %v465 = vld [vmem:[#allocation2 + $0xd28] sm:$0xff]
    %v466 = vld [vmem:[#allocation2 + $0xd30] sm:$0xff]
    %v467 = vld [vmem:[#allocation2 + $0xd38] sm:$0xff]
    %v468 = vld [vmem:[#allocation2 + $0xd40] sm:$0xff]
    %v469 = vld [vmem:[#allocation2 + $0xd48] sm:$0xff]
    %v470 = vld [vmem:[#allocation2 + $0xd50] sm:$0xff]
    %v471 = vld [vmem:[#allocation2 + $0xd58] sm:$0xff]
    %v472 = vld [vmem:[#allocation2 + $0xd60] sm:$0xff]
    %v473 = vld [vmem:[#allocation2 + $0xd68] sm:$0xff]
    %v474 = vld [vmem:[#allocation2 + $0xd70] sm:$0xff]
    %v475 = vld [vmem:[#allocation2 + $0xd78] sm:$0xff]
    %v476 = vld [vmem:[#allocation2 + $0xd80] sm:$0xff]
    %v477 = vld [vmem:[#allocation2 + $0xd88] sm:$0xff]
    %v478 = vld [vmem:[#allocation2 + $0xd90] sm:$0xff]
    %v479 = vld [vmem:[#allocation2 + $0xd98] sm:$0xff]
    %v480 = vld [vmem:[#allocation2 + $0xda0] sm:$0xff]
    %v481 = vld [vmem:[#allocation2 + $0xda8] sm:$0xff]
    %v482 = vld [vmem:[#allocation2 + $0xdb0] sm:$0xff]
    %v483 = vld [vmem:[#allocation2 + $0xdb8] sm:$0xff]
    %v484 = vld [vmem:[#allocation2 + $0xdc0] sm:$0xff]
    %v485 = vld [vmem:[#allocation2 + $0xdc8] sm:$0xff]
    %v486 = vld [vmem:[#allocation2 + $0xdd0] sm:$0xff]
    %v487 = vld [vmem:[#allocation2 + $0xdd8] sm:$0xff]
    %v488 = vld [vmem:[#allocation2 + $0xde0] sm:$0xff]
    %v489 = vld [vmem:[#allocation2 + $0xde8] sm:$0xff]
    %v490 = vld [vmem:[#allocation2 + $0xdf0] sm:$0xff]
    %v491 = vld [vmem:[#allocation2 + $0xdf8] sm:$0xff]
    %v492 = vld [vmem:[#allocation2 + $0xe00] sm:$0xff]
    %v493 = vld [vmem:[#allocation2 + $0xe08] sm:$0xff]
    %v494 = vld [vmem:[#allocation2 + $0xe10] sm:$0xff]
    %v495 = vld [vmem:[#allocation2 + $0xe18] sm:$0xff]
    %v496 = vld [vmem:[#allocation2 + $0xe20] sm:$0xff]
    %v497 = vld [vmem:[#allocation2 + $0xe28] sm:$0xff]
    %v498 = vld [vmem:[#allocation2 + $0xe30] sm:$0xff]
    %v499 = vld [vmem:[#allocation2 + $0xe38] sm:$0xff]
    %v500 = vld [vmem:[#allocation2 + $0xe40] sm:$0xff]
    %v501 = vld [vmem:[#allocation2 + $0xe48] sm:$0xff]
    %v502 = vld [vmem:[#allocation2 + $0xe50] sm:$0xff]
    %v503 = vld [vmem:[#allocation2 + $0xe58] sm:$0xff]
    %v504 = vld [vmem:[#allocation2 + $0xe60] sm:$0xff]
    %v505 = vld [vmem:[#allocation2 + $0xe68] sm:$0xff]
    %v506 = vld [vmem:[#allocation2 + $0xe70] sm:$0xff]
    %v507 = vld [vmem:[#allocation2 + $0xe78] sm:$0xff]
    %v508 = vld [vmem:[#allocation2 + $0xe80] sm:$0xff]
    %v509 = vld [vmem:[#allocation2 + $0xe88] sm:$0xff]
    %v510 = vld [vmem:[#allocation2 + $0xe90] sm:$0xff]
    %v511 = vld [vmem:[#allocation2 + $0xe98] sm:$0xff]
    %v512 = vld [vmem:[#allocation2 + $0xea0] sm:$0xff]
    %v513 = vld [vmem:[#allocation2 + $0xea8] sm:$0xff]
    %v514 = vld [vmem:[#allocation2 + $0xeb0] sm:$0xff]
    %v515 = vld [vmem:[#allocation2 + $0xeb8] sm:$0xff]
    %v516 = vld [vmem:[#allocation2 + $0xec0] sm:$0xff]
    %v517 = vld [vmem:[#allocation2 + $0xec8] sm:$0xff]
    %v518 = vld [vmem:[#allocation2 + $0xed0] sm:$0xff]
    %v519 = vld [vmem:[#allocation2 + $0xed8] sm:$0xff]
    %v520 = vld [vmem:[#allocation2 + $0xee0] sm:$0xff]
    %v521 = vld [vmem:[#allocation2 + $0xee8] sm:$0xff]
    %v522 = vld [vmem:[#allocation2 + $0xef0] sm:$0xff]
    %v523 = vld [vmem:[#allocation2 + $0xef8] sm:$0xff]
    %v524 = vld [vmem:[#allocation2 + $0xf00] sm:$0xff]
    %v525 = vld [vmem:[#allocation2 + $0xf08] sm:$0xff]
    %v526 = vld [vmem:[#allocation2 + $0xf10] sm:$0xff]
    %v527 = vld [vmem:[#allocation2 + $0xf18] sm:$0xff]
    %v528 = vld [vmem:[#allocation2 + $0xf20] sm:$0xff]
    %v529 = vld [vmem:[#allocation2 + $0xf28] sm:$0xff]
    %v530 = vld [vmem:[#allocation2 + $0xf30] sm:$0xff]
    %v531 = vld [vmem:[#allocation2 + $0xf38] sm:$0xff]
    %v532 = vld [vmem:[#allocation2 + $0xf40] sm:$0xff]
    %v533 = vld [vmem:[#allocation2 + $0xf48] sm:$0xff]
    %v534 = vld [vmem:[#allocation2 + $0xf50] sm:$0xff]
    %v535 = vld [vmem:[#allocation2 + $0xf58] sm:$0xff]
    %v536 = vld [vmem:[#allocation2 + $0xf60] sm:$0xff]
    %v537 = vld [vmem:[#allocation2 + $0xf68] sm:$0xff]
    %v538 = vld [vmem:[#allocation2 + $0xf70] sm:$0xff]
    %v539 = vld [vmem:[#allocation2 + $0xf78] sm:$0xff]
    %v540 = vld [vmem:[#allocation2 + $0xf80] sm:$0xff]
    %v541 = vld [vmem:[#allocation2 + $0xf88] sm:$0xff]
    %v542 = vld [vmem:[#allocation2 + $0xf90] sm:$0xff]
    %v543 = vld [vmem:[#allocation2 + $0xf98] sm:$0xff]
    %v544 = vld [vmem:[#allocation2 + $0xfa0] sm:$0xff]
    %v545 = vld [vmem:[#allocation2 + $0xfa8] sm:$0xff]
    %v546 = vld [vmem:[#allocation2 + $0xfb0] sm:$0xff]
    %v547 = vld [vmem:[#allocation2 + $0xfb8] sm:$0xff]
    %v548 = vld [vmem:[#allocation2 + $0xfc0] sm:$0xff]
    %v549 = vld [vmem:[#allocation2 + $0xfc8] sm:$0xff]
    %v550 = vld [vmem:[#allocation2 + $0xfd0] sm:$0xff]
    %v551 = vld [vmem:[#allocation2 + $0xfd8] sm:$0xff]
    %v552 = vld [vmem:[#allocation2 + $0xfe0] sm:$0xff]
    %v553 = vld [vmem:[#allocation2 + $0xfe8] sm:$0xff]
    %v554 = vld [vmem:[#allocation2 + $0xff0] sm:$0xff]
    %v555 = vld [vmem:[#allocation2 + $0xff8] sm:$0xff]
    %v556 = vld [vmem:[#allocation4] sm:$0xff]
    %v558 = vlaneseq
    %v559 = vshrl.u32 %v558, 7
    %v560 = vsub.s32 0, %v559
    %v561 = vrot.slane %v556, %v560
    %v562 = vlaneseq
    %v563 = vshrl.u32 %v562, 7
    %v564 = vsub.s32 1, %v563
    %v565 = vrot.slane %v556, %v564
    %v566 = vlaneseq
    %v567 = vshrl.u32 %v566, 7
    %v568 = vsub.s32 2, %v567
    %v569 = vrot.slane %v556, %v568
    %v570 = vlaneseq
    %v571 = vshrl.u32 %v570, 7
    %v572 = vsub.s32 3, %v571
    %v573 = vrot.slane %v556, %v572
    %v574 = vlaneseq
    %v575 = vshrl.u32 %v574, 7
    %v576 = vsub.s32 4, %v575
    %v577 = vrot.slane %v556, %v576
    %v578 = vlaneseq
    %v579 = vshrl.u32 %v578, 7
    %v580 = vsub.s32 5, %v579
    %v581 = vrot.slane %v556, %v580
    %v582 = vlaneseq
    %v583 = vshrl.u32 %v582, 7
    %v584 = vsub.s32 6, %v583
    %v585 = vrot.slane %v556, %v584
    %v586 = vlaneseq
    %v587 = vshrl.u32 %v586, 7
    %v588 = vsub.s32 7, %v587
    %v589 = vrot.slane %v556, %v588
    %v602 = vunpack.c.l.b16 %v40
    %v603 = vunpack.c.h.b16 %v40
    %v604 = vunpack.c.l.b16 %v41
    %v605 = vunpack.c.h.b16 %v41
    %v606 = vunpack.c.l.b16 %v42
    %v607 = vunpack.c.h.b16 %v42
    %v608 = vunpack.c.l.b16 %v43
    %v609 = vunpack.c.h.b16 %v43
    %v610 = vpack.c.b16 %v602, %v602
    %v611 = vpack.c.b16 %v603, %v603
    %v612 = vpack.c.b16 %v604, %v604
    %v613 = vpack.c.b16 %v605, %v605
    %v614 = vpack.c.b16 %v606, %v606
    %v615 = vpack.c.b16 %v607, %v607
    %v616 = vpack.c.b16 %v608, %v608
    %v617 = vpack.c.b16 %v609, %v609
    %v1138 = vunpack.c.l.b16 %v44
    %v1139 = vunpack.c.h.b16 %v44
    %v1140 = vunpack.c.l.b16 %v45
    %v1141 = vunpack.c.h.b16 %v45
    %v1142 = vunpack.c.l.b16 %v46
    %v1143 = vunpack.c.h.b16 %v46
    %v1144 = vunpack.c.l.b16 %v47
    %v1145 = vunpack.c.h.b16 %v47
    %v1146 = vunpack.c.l.b16 %v48
    %v1147 = vunpack.c.h.b16 %v48
    %v1148 = vunpack.c.l.b16 %v49
    %v1149 = vunpack.c.h.b16 %v49
    %v1150 = vunpack.c.l.b16 %v50
    %v1151 = vunpack.c.h.b16 %v50
    %v1152 = vunpack.c.l.b16 %v51
    %v1153 = vunpack.c.h.b16 %v51
    %v1154 = vunpack.c.l.b16 %v52
    %v1155 = vunpack.c.h.b16 %v52
    %v1156 = vunpack.c.l.b16 %v53
    %v1157 = vunpack.c.h.b16 %v53
    %v1158 = vunpack.c.l.b16 %v54
    %v1159 = vunpack.c.h.b16 %v54
    %v1160 = vunpack.c.l.b16 %v55
    %v1161 = vunpack.c.h.b16 %v55
    %v1162 = vunpack.c.l.b16 %v56
    %v1163 = vunpack.c.h.b16 %v56
    %v1164 = vunpack.c.l.b16 %v57
    %v1165 = vunpack.c.h.b16 %v57
    %v1166 = vunpack.c.l.b16 %v58
    %v1167 = vunpack.c.h.b16 %v58
    %v1168 = vunpack.c.l.b16 %v59
    %v1169 = vunpack.c.h.b16 %v59
    %v1170 = vunpack.c.l.b16 %v60
    %v1171 = vunpack.c.h.b16 %v60
    %v1172 = vunpack.c.l.b16 %v61
    %v1173 = vunpack.c.h.b16 %v61
    %v1174 = vunpack.c.l.b16 %v62
    %v1175 = vunpack.c.h.b16 %v62
    %v1176 = vunpack.c.l.b16 %v63
    %v1177 = vunpack.c.h.b16 %v63
    %v1178 = vunpack.c.l.b16 %v64
    %v1179 = vunpack.c.h.b16 %v64
    %v1180 = vunpack.c.l.b16 %v65
    %v1181 = vunpack.c.h.b16 %v65
    %v1182 = vunpack.c.l.b16 %v66
    %v1183 = vunpack.c.h.b16 %v66
    %v1184 = vunpack.c.l.b16 %v67
    %v1185 = vunpack.c.h.b16 %v67
    %v1186 = vunpack.c.l.b16 %v68
    %v1187 = vunpack.c.h.b16 %v68
    %v1188 = vunpack.c.l.b16 %v69
    %v1189 = vunpack.c.h.b16 %v69
    %v1190 = vunpack.c.l.b16 %v70
    %v1191 = vunpack.c.h.b16 %v70
    %v1192 = vunpack.c.l.b16 %v71
    %v1193 = vunpack.c.h.b16 %v71
    %v1194 = vunpack.c.l.b16 %v72
    %v1195 = vunpack.c.h.b16 %v72
    %v1196 = vunpack.c.l.b16 %v73
    %v1197 = vunpack.c.h.b16 %v73
    %v1198 = vunpack.c.l.b16 %v74
    %v1199 = vunpack.c.h.b16 %v74
    %v1200 = vunpack.c.l.b16 %v75
    %v1201 = vunpack.c.h.b16 %v75
    %v1202 = vunpack.c.l.b16 %v76
    %v1203 = vunpack.c.h.b16 %v76
    %v1204 = vunpack.c.l.b16 %v77
    %v1205 = vunpack.c.h.b16 %v77
    %v1206 = vunpack.c.l.b16 %v78
    %v1207 = vunpack.c.h.b16 %v78
    %v1208 = vunpack.c.l.b16 %v79
    %v1209 = vunpack.c.h.b16 %v79
    %v1210 = vunpack.c.l.b16 %v80
    %v1211 = vunpack.c.h.b16 %v80
    %v1212 = vunpack.c.l.b16 %v81
    %v1213 = vunpack.c.h.b16 %v81
    %v1214 = vunpack.c.l.b16 %v82
    %v1215 = vunpack.c.h.b16 %v82
    %v1216 = vunpack.c.l.b16 %v83
    %v1217 = vunpack.c.h.b16 %v83
    %v1218 = vunpack.c.l.b16 %v84
    %v1219 = vunpack.c.h.b16 %v84
    %v1220 = vunpack.c.l.b16 %v85
    %v1221 = vunpack.c.h.b16 %v85
    %v1222 = vunpack.c.l.b16 %v86
    %v1223 = vunpack.c.h.b16 %v86
    %v1224 = vunpack.c.l.b16 %v87
    %v1225 = vunpack.c.h.b16 %v87
    %v1226 = vunpack.c.l.b16 %v88
    %v1227 = vunpack.c.h.b16 %v88
    %v1228 = vunpack.c.l.b16 %v89
    %v1229 = vunpack.c.h.b16 %v89
    %v1230 = vunpack.c.l.b16 %v90
    %v1231 = vunpack.c.h.b16 %v90
    %v1232 = vunpack.c.l.b16 %v91
    %v1233 = vunpack.c.h.b16 %v91
    %v1234 = vunpack.c.l.b16 %v92
    %v1235 = vunpack.c.h.b16 %v92
    %v1236 = vunpack.c.l.b16 %v93
    %v1237 = vunpack.c.h.b16 %v93
    %v1238 = vunpack.c.l.b16 %v94
    %v1239 = vunpack.c.h.b16 %v94
    %v1240 = vunpack.c.l.b16 %v95
    %v1241 = vunpack.c.h.b16 %v95
    %v1242 = vunpack.c.l.b16 %v96
    %v1243 = vunpack.c.h.b16 %v96
    %v1244 = vunpack.c.l.b16 %v97
    %v1245 = vunpack.c.h.b16 %v97
    %v1246 = vunpack.c.l.b16 %v98
    %v1247 = vunpack.c.h.b16 %v98
    %v1248 = vunpack.c.l.b16 %v99
    %v1249 = vunpack.c.h.b16 %v99
    %v1250 = vunpack.c.l.b16 %v100
    %v1251 = vunpack.c.h.b16 %v100
    %v1252 = vunpack.c.l.b16 %v101
    %v1253 = vunpack.c.h.b16 %v101
    %v1254 = vunpack.c.l.b16 %v102
    %v1255 = vunpack.c.h.b16 %v102
    %v1256 = vunpack.c.l.b16 %v103
    %v1257 = vunpack.c.h.b16 %v103
    %v1258 = vunpack.c.l.b16 %v104
    %v1259 = vunpack.c.h.b16 %v104
    %v1260 = vunpack.c.l.b16 %v105
    %v1261 = vunpack.c.h.b16 %v105
    %v1262 = vunpack.c.l.b16 %v106
    %v1263 = vunpack.c.h.b16 %v106
    %v1264 = vunpack.c.l.b16 %v107
    %v1265 = vunpack.c.h.b16 %v107
    %v1266 = vunpack.c.l.b16 %v108
    %v1267 = vunpack.c.h.b16 %v108
    %v1268 = vunpack.c.l.b16 %v109
    %v1269 = vunpack.c.h.b16 %v109
    %v1270 = vunpack.c.l.b16 %v110
    %v1271 = vunpack.c.h.b16 %v110
    %v1272 = vunpack.c.l.b16 %v111
    %v1273 = vunpack.c.h.b16 %v111
    %v1274 = vunpack.c.l.b16 %v112
    %v1275 = vunpack.c.h.b16 %v112
    %v1276 = vunpack.c.l.b16 %v113
    %v1277 = vunpack.c.h.b16 %v113
    %v1278 = vunpack.c.l.b16 %v114
    %v1279 = vunpack.c.h.b16 %v114
    %v1280 = vunpack.c.l.b16 %v115
    %v1281 = vunpack.c.h.b16 %v115
    %v1282 = vunpack.c.l.b16 %v116
    %v1283 = vunpack.c.h.b16 %v116
    %v1284 = vunpack.c.l.b16 %v117
    %v1285 = vunpack.c.h.b16 %v117
    %v1286 = vunpack.c.l.b16 %v118
    %v1287 = vunpack.c.h.b16 %v118
    %v1288 = vunpack.c.l.b16 %v119
    %v1289 = vunpack.c.h.b16 %v119
    %v1290 = vunpack.c.l.b16 %v120
    %v1291 = vunpack.c.h.b16 %v120
    %v1292 = vunpack.c.l.b16 %v121
    %v1293 = vunpack.c.h.b16 %v121
    %v1294 = vunpack.c.l.b16 %v122
    %v1295 = vunpack.c.h.b16 %v122
    %v1296 = vunpack.c.l.b16 %v123
    %v1297 = vunpack.c.h.b16 %v123
    %v1298 = vunpack.c.l.b16 %v124
    %v1299 = vunpack.c.h.b16 %v124
    %v1300 = vunpack.c.l.b16 %v125
    %v1301 = vunpack.c.h.b16 %v125
    %v1302 = vunpack.c.l.b16 %v126
    %v1303 = vunpack.c.h.b16 %v126
    %v1304 = vunpack.c.l.b16 %v127
    %v1305 = vunpack.c.h.b16 %v127
    %v1306 = vunpack.c.l.b16 %v128
    %v1307 = vunpack.c.h.b16 %v128
    %v1308 = vunpack.c.l.b16 %v129
    %v1309 = vunpack.c.h.b16 %v129
    %v1310 = vunpack.c.l.b16 %v130
    %v1311 = vunpack.c.h.b16 %v130
    %v1312 = vunpack.c.l.b16 %v131
    %v1313 = vunpack.c.h.b16 %v131
    %v1314 = vunpack.c.l.b16 %v132
    %v1315 = vunpack.c.h.b16 %v132
    %v1316 = vunpack.c.l.b16 %v133
    %v1317 = vunpack.c.h.b16 %v133
    %v1318 = vunpack.c.l.b16 %v134
    %v1319 = vunpack.c.h.b16 %v134
    %v1320 = vunpack.c.l.b16 %v135
    %v1321 = vunpack.c.h.b16 %v135
    %v1322 = vunpack.c.l.b16 %v136
    %v1323 = vunpack.c.h.b16 %v136
    %v1324 = vunpack.c.l.b16 %v137
    %v1325 = vunpack.c.h.b16 %v137
    %v1326 = vunpack.c.l.b16 %v138
    %v1327 = vunpack.c.h.b16 %v138
    %v1328 = vunpack.c.l.b16 %v139
    %v1329 = vunpack.c.h.b16 %v139
    %v1330 = vunpack.c.l.b16 %v140
    %v1331 = vunpack.c.h.b16 %v140
    %v1332 = vunpack.c.l.b16 %v141
    %v1333 = vunpack.c.h.b16 %v141
    %v1334 = vunpack.c.l.b16 %v142
    %v1335 = vunpack.c.h.b16 %v142
    %v1336 = vunpack.c.l.b16 %v143
    %v1337 = vunpack.c.h.b16 %v143
    %v1338 = vunpack.c.l.b16 %v144
    %v1339 = vunpack.c.h.b16 %v144
    %v1340 = vunpack.c.l.b16 %v145
    %v1341 = vunpack.c.h.b16 %v145
    %v1342 = vunpack.c.l.b16 %v146
    %v1343 = vunpack.c.h.b16 %v146
    %v1344 = vunpack.c.l.b16 %v147
    %v1345 = vunpack.c.h.b16 %v147
    %v1346 = vunpack.c.l.b16 %v148
    %v1347 = vunpack.c.h.b16 %v148
    %v1348 = vunpack.c.l.b16 %v149
    %v1349 = vunpack.c.h.b16 %v149
    %v1350 = vunpack.c.l.b16 %v150
    %v1351 = vunpack.c.h.b16 %v150
    %v1352 = vunpack.c.l.b16 %v151
    %v1353 = vunpack.c.h.b16 %v151
    %v1354 = vunpack.c.l.b16 %v152
    %v1355 = vunpack.c.h.b16 %v152
    %v1356 = vunpack.c.l.b16 %v153
    %v1357 = vunpack.c.h.b16 %v153
    %v1358 = vunpack.c.l.b16 %v154
    %v1359 = vunpack.c.h.b16 %v154
    %v1360 = vunpack.c.l.b16 %v155
    %v1361 = vunpack.c.h.b16 %v155
    %v1362 = vunpack.c.l.b16 %v156
    %v1363 = vunpack.c.h.b16 %v156
    %v1364 = vunpack.c.l.b16 %v157
    %v1365 = vunpack.c.h.b16 %v157
    %v1366 = vunpack.c.l.b16 %v158
    %v1367 = vunpack.c.h.b16 %v158
    %v1368 = vunpack.c.l.b16 %v159
    %v1369 = vunpack.c.h.b16 %v159
    %v1370 = vunpack.c.l.b16 %v160
    %v1371 = vunpack.c.h.b16 %v160
    %v1372 = vunpack.c.l.b16 %v161
    %v1373 = vunpack.c.h.b16 %v161
    %v1374 = vunpack.c.l.b16 %v162
    %v1375 = vunpack.c.h.b16 %v162
    %v1376 = vunpack.c.l.b16 %v163
    %v1377 = vunpack.c.h.b16 %v163
    %v1378 = vunpack.c.l.b16 %v164
    %v1379 = vunpack.c.h.b16 %v164
    %v1380 = vunpack.c.l.b16 %v165
    %v1381 = vunpack.c.h.b16 %v165
    %v1382 = vunpack.c.l.b16 %v166
    %v1383 = vunpack.c.h.b16 %v166
    %v1384 = vunpack.c.l.b16 %v167
    %v1385 = vunpack.c.h.b16 %v167
    %v1386 = vunpack.c.l.b16 %v168
    %v1387 = vunpack.c.h.b16 %v168
    %v1388 = vunpack.c.l.b16 %v169
    %v1389 = vunpack.c.h.b16 %v169
    %v1390 = vunpack.c.l.b16 %v170
    %v1391 = vunpack.c.h.b16 %v170
    %v1392 = vunpack.c.l.b16 %v171
    %v1393 = vunpack.c.h.b16 %v171
    %v1394 = vunpack.c.l.b16 %v172
    %v1395 = vunpack.c.h.b16 %v172
    %v1396 = vunpack.c.l.b16 %v173
    %v1397 = vunpack.c.h.b16 %v173
    %v1398 = vunpack.c.l.b16 %v174
    %v1399 = vunpack.c.h.b16 %v174
    %v1400 = vunpack.c.l.b16 %v175
    %v1401 = vunpack.c.h.b16 %v175
    %v1402 = vunpack.c.l.b16 %v176
    %v1403 = vunpack.c.h.b16 %v176
    %v1404 = vunpack.c.l.b16 %v177
    %v1405 = vunpack.c.h.b16 %v177
    %v1406 = vunpack.c.l.b16 %v178
    %v1407 = vunpack.c.h.b16 %v178
    %v1408 = vunpack.c.l.b16 %v179
    %v1409 = vunpack.c.h.b16 %v179
    %v1410 = vunpack.c.l.b16 %v180
    %v1411 = vunpack.c.h.b16 %v180
    %v1412 = vunpack.c.l.b16 %v181
    %v1413 = vunpack.c.h.b16 %v181
    %v1414 = vunpack.c.l.b16 %v182
    %v1415 = vunpack.c.h.b16 %v182
    %v1416 = vunpack.c.l.b16 %v183
    %v1417 = vunpack.c.h.b16 %v183
    %v1418 = vunpack.c.l.b16 %v184
    %v1419 = vunpack.c.h.b16 %v184
    %v1420 = vunpack.c.l.b16 %v185
    %v1421 = vunpack.c.h.b16 %v185
    %v1422 = vunpack.c.l.b16 %v186
    %v1423 = vunpack.c.h.b16 %v186
    %v1424 = vunpack.c.l.b16 %v187
    %v1425 = vunpack.c.h.b16 %v187
    %v1426 = vunpack.c.l.b16 %v188
    %v1427 = vunpack.c.h.b16 %v188
    %v1428 = vunpack.c.l.b16 %v189
    %v1429 = vunpack.c.h.b16 %v189
    %v1430 = vunpack.c.l.b16 %v190
    %v1431 = vunpack.c.h.b16 %v190
    %v1432 = vunpack.c.l.b16 %v191
    %v1433 = vunpack.c.h.b16 %v191
    %v1434 = vunpack.c.l.b16 %v192
    %v1435 = vunpack.c.h.b16 %v192
    %v1436 = vunpack.c.l.b16 %v193
    %v1437 = vunpack.c.h.b16 %v193
    %v1438 = vunpack.c.l.b16 %v194
    %v1439 = vunpack.c.h.b16 %v194
    %v1440 = vunpack.c.l.b16 %v195
    %v1441 = vunpack.c.h.b16 %v195
    %v1442 = vunpack.c.l.b16 %v196
    %v1443 = vunpack.c.h.b16 %v196
    %v1444 = vunpack.c.l.b16 %v197
    %v1445 = vunpack.c.h.b16 %v197
    %v1446 = vunpack.c.l.b16 %v198
    %v1447 = vunpack.c.h.b16 %v198
    %v1448 = vunpack.c.l.b16 %v199
    %v1449 = vunpack.c.h.b16 %v199
    %v1450 = vunpack.c.l.b16 %v200
    %v1451 = vunpack.c.h.b16 %v200
    %v1452 = vunpack.c.l.b16 %v201
    %v1453 = vunpack.c.h.b16 %v201
    %v1454 = vunpack.c.l.b16 %v202
    %v1455 = vunpack.c.h.b16 %v202
    %v1456 = vunpack.c.l.b16 %v203
    %v1457 = vunpack.c.h.b16 %v203
    %v1458 = vunpack.c.l.b16 %v204
    %v1459 = vunpack.c.h.b16 %v204
    %v1460 = vunpack.c.l.b16 %v205
    %v1461 = vunpack.c.h.b16 %v205
    %v1462 = vunpack.c.l.b16 %v206
    %v1463 = vunpack.c.h.b16 %v206
    %v1464 = vunpack.c.l.b16 %v207
    %v1465 = vunpack.c.h.b16 %v207
    %v1466 = vunpack.c.l.b16 %v208
    %v1467 = vunpack.c.h.b16 %v208
    %v1468 = vunpack.c.l.b16 %v209
    %v1469 = vunpack.c.h.b16 %v209
    %v1470 = vunpack.c.l.b16 %v210
    %v1471 = vunpack.c.h.b16 %v210
    %v1472 = vunpack.c.l.b16 %v211
    %v1473 = vunpack.c.h.b16 %v211
    %v1474 = vunpack.c.l.b16 %v212
    %v1475 = vunpack.c.h.b16 %v212
    %v1476 = vunpack.c.l.b16 %v213
    %v1477 = vunpack.c.h.b16 %v213
    %v1478 = vunpack.c.l.b16 %v214
    %v1479 = vunpack.c.h.b16 %v214
    %v1480 = vunpack.c.l.b16 %v215
    %v1481 = vunpack.c.h.b16 %v215
    %v1482 = vunpack.c.l.b16 %v216
    %v1483 = vunpack.c.h.b16 %v216
    %v1484 = vunpack.c.l.b16 %v217
    %v1485 = vunpack.c.h.b16 %v217
    %v1486 = vunpack.c.l.b16 %v218
    %v1487 = vunpack.c.h.b16 %v218
    %v1488 = vunpack.c.l.b16 %v219
    %v1489 = vunpack.c.h.b16 %v219
    %v1490 = vunpack.c.l.b16 %v220
    %v1491 = vunpack.c.h.b16 %v220
    %v1492 = vunpack.c.l.b16 %v221
    %v1493 = vunpack.c.h.b16 %v221
    %v1494 = vunpack.c.l.b16 %v222
    %v1495 = vunpack.c.h.b16 %v222
    %v1496 = vunpack.c.l.b16 %v223
    %v1497 = vunpack.c.h.b16 %v223
    %v1498 = vunpack.c.l.b16 %v224
    %v1499 = vunpack.c.h.b16 %v224
    %v1500 = vunpack.c.l.b16 %v225
    %v1501 = vunpack.c.h.b16 %v225
    %v1502 = vunpack.c.l.b16 %v226
    %v1503 = vunpack.c.h.b16 %v226
    %v1504 = vunpack.c.l.b16 %v227
    %v1505 = vunpack.c.h.b16 %v227
    %v1506 = vunpack.c.l.b16 %v228
    %v1507 = vunpack.c.h.b16 %v228
    %v1508 = vunpack.c.l.b16 %v229
    %v1509 = vunpack.c.h.b16 %v229
    %v1510 = vunpack.c.l.b16 %v230
    %v1511 = vunpack.c.h.b16 %v230
    %v1512 = vunpack.c.l.b16 %v231
    %v1513 = vunpack.c.h.b16 %v231
    %v1514 = vunpack.c.l.b16 %v232
    %v1515 = vunpack.c.h.b16 %v232
    %v1516 = vunpack.c.l.b16 %v233
    %v1517 = vunpack.c.h.b16 %v233
    %v1518 = vunpack.c.l.b16 %v234
    %v1519 = vunpack.c.h.b16 %v234
    %v1520 = vunpack.c.l.b16 %v235
    %v1521 = vunpack.c.h.b16 %v235
    %v1522 = vunpack.c.l.b16 %v236
    %v1523 = vunpack.c.h.b16 %v236
    %v1524 = vunpack.c.l.b16 %v237
    %v1525 = vunpack.c.h.b16 %v237
    %v1526 = vunpack.c.l.b16 %v238
    %v1527 = vunpack.c.h.b16 %v238
    %v1528 = vunpack.c.l.b16 %v239
    %v1529 = vunpack.c.h.b16 %v239
    %v1530 = vunpack.c.l.b16 %v240
    %v1531 = vunpack.c.h.b16 %v240
    %v1532 = vunpack.c.l.b16 %v241
    %v1533 = vunpack.c.h.b16 %v241
    %v1534 = vunpack.c.l.b16 %v242
    %v1535 = vunpack.c.h.b16 %v242
    %v1536 = vunpack.c.l.b16 %v243
    %v1537 = vunpack.c.h.b16 %v243
    %v1538 = vunpack.c.l.b16 %v244
    %v1539 = vunpack.c.h.b16 %v244
    %v1540 = vunpack.c.l.b16 %v245
    %v1541 = vunpack.c.h.b16 %v245
    %v1542 = vunpack.c.l.b16 %v246
    %v1543 = vunpack.c.h.b16 %v246
    %v1544 = vunpack.c.l.b16 %v247
    %v1545 = vunpack.c.h.b16 %v247
    %v1546 = vunpack.c.l.b16 %v248
    %v1547 = vunpack.c.h.b16 %v248
    %v1548 = vunpack.c.l.b16 %v249
    %v1549 = vunpack.c.h.b16 %v249
    %v1550 = vunpack.c.l.b16 %v250
    %v1551 = vunpack.c.h.b16 %v250
    %v1552 = vunpack.c.l.b16 %v251
    %v1553 = vunpack.c.h.b16 %v251
    %v1554 = vunpack.c.l.b16 %v252
    %v1555 = vunpack.c.h.b16 %v252
    %v1556 = vunpack.c.l.b16 %v253
    %v1557 = vunpack.c.h.b16 %v253
    %v1558 = vunpack.c.l.b16 %v254
    %v1559 = vunpack.c.h.b16 %v254
    %v1560 = vunpack.c.l.b16 %v255
    %v1561 = vunpack.c.h.b16 %v255
    %v1562 = vunpack.c.l.b16 %v256
    %v1563 = vunpack.c.h.b16 %v256
    %v1564 = vunpack.c.l.b16 %v257
    %v1565 = vunpack.c.h.b16 %v257
    %v1566 = vunpack.c.l.b16 %v258
    %v1567 = vunpack.c.h.b16 %v258
    %v1568 = vunpack.c.l.b16 %v259
    %v1569 = vunpack.c.h.b16 %v259
    %v1570 = vunpack.c.l.b16 %v260
    %v1571 = vunpack.c.h.b16 %v260
    %v1572 = vunpack.c.l.b16 %v261
    %v1573 = vunpack.c.h.b16 %v261
    %v1574 = vunpack.c.l.b16 %v262
    %v1575 = vunpack.c.h.b16 %v262
    %v1576 = vunpack.c.l.b16 %v263
    %v1577 = vunpack.c.h.b16 %v263
    %v1578 = vunpack.c.l.b16 %v264
    %v1579 = vunpack.c.h.b16 %v264
    %v1580 = vunpack.c.l.b16 %v265
    %v1581 = vunpack.c.h.b16 %v265
    %v1582 = vunpack.c.l.b16 %v266
    %v1583 = vunpack.c.h.b16 %v266
    %v1584 = vunpack.c.l.b16 %v267
    %v1585 = vunpack.c.h.b16 %v267
    %v1586 = vunpack.c.l.b16 %v268
    %v1587 = vunpack.c.h.b16 %v268
    %v1588 = vunpack.c.l.b16 %v269
    %v1589 = vunpack.c.h.b16 %v269
    %v1590 = vunpack.c.l.b16 %v270
    %v1591 = vunpack.c.h.b16 %v270
    %v1592 = vunpack.c.l.b16 %v271
    %v1593 = vunpack.c.h.b16 %v271
    %v1594 = vunpack.c.l.b16 %v272
    %v1595 = vunpack.c.h.b16 %v272
    %v1596 = vunpack.c.l.b16 %v273
    %v1597 = vunpack.c.h.b16 %v273
    %v1598 = vunpack.c.l.b16 %v274
    %v1599 = vunpack.c.h.b16 %v274
    %v1600 = vunpack.c.l.b16 %v275
    %v1601 = vunpack.c.h.b16 %v275
    %v1602 = vunpack.c.l.b16 %v276
    %v1603 = vunpack.c.h.b16 %v276
    %v1604 = vunpack.c.l.b16 %v277
    %v1605 = vunpack.c.h.b16 %v277
    %v1606 = vunpack.c.l.b16 %v278
    %v1607 = vunpack.c.h.b16 %v278
    %v1608 = vunpack.c.l.b16 %v279
    %v1609 = vunpack.c.h.b16 %v279
    %v1610 = vunpack.c.l.b16 %v280
    %v1611 = vunpack.c.h.b16 %v280
    %v1612 = vunpack.c.l.b16 %v281
    %v1613 = vunpack.c.h.b16 %v281
    %v1614 = vunpack.c.l.b16 %v282
    %v1615 = vunpack.c.h.b16 %v282
    %v1616 = vunpack.c.l.b16 %v283
    %v1617 = vunpack.c.h.b16 %v283
    %v1618 = vunpack.c.l.b16 %v284
    %v1619 = vunpack.c.h.b16 %v284
    %v1620 = vunpack.c.l.b16 %v285
    %v1621 = vunpack.c.h.b16 %v285
    %v1622 = vunpack.c.l.b16 %v286
    %v1623 = vunpack.c.h.b16 %v286
    %v1624 = vunpack.c.l.b16 %v287
    %v1625 = vunpack.c.h.b16 %v287
    %v1626 = vunpack.c.l.b16 %v288
    %v1627 = vunpack.c.h.b16 %v288
    %v1628 = vunpack.c.l.b16 %v289
    %v1629 = vunpack.c.h.b16 %v289
    %v1630 = vunpack.c.l.b16 %v290
    %v1631 = vunpack.c.h.b16 %v290
    %v1632 = vunpack.c.l.b16 %v291
    %v1633 = vunpack.c.h.b16 %v291
    %v1634 = vunpack.c.l.b16 %v292
    %v1635 = vunpack.c.h.b16 %v292
    %v1636 = vunpack.c.l.b16 %v293
    %v1637 = vunpack.c.h.b16 %v293
    %v1638 = vunpack.c.l.b16 %v294
    %v1639 = vunpack.c.h.b16 %v294
    %v1640 = vunpack.c.l.b16 %v295
    %v1641 = vunpack.c.h.b16 %v295
    %v1642 = vunpack.c.l.b16 %v296
    %v1643 = vunpack.c.h.b16 %v296
    %v1644 = vunpack.c.l.b16 %v297
    %v1645 = vunpack.c.h.b16 %v297
    %v1646 = vunpack.c.l.b16 %v298
    %v1647 = vunpack.c.h.b16 %v298
    %v1648 = vunpack.c.l.b16 %v299
    %v1649 = vunpack.c.h.b16 %v299
    %v1650 = vunpack.c.l.b16 %v300
    %v1651 = vunpack.c.h.b16 %v300
    %v1652 = vunpack.c.l.b16 %v301
    %v1653 = vunpack.c.h.b16 %v301
    %v1654 = vunpack.c.l.b16 %v302
    %v1655 = vunpack.c.h.b16 %v302
    %v1656 = vunpack.c.l.b16 %v303
    %v1657 = vunpack.c.h.b16 %v303
    %v1658 = vunpack.c.l.b16 %v304
    %v1659 = vunpack.c.h.b16 %v304
    %v1660 = vunpack.c.l.b16 %v305
    %v1661 = vunpack.c.h.b16 %v305
    %v1662 = vunpack.c.l.b16 %v306
    %v1663 = vunpack.c.h.b16 %v306
    %v1664 = vunpack.c.l.b16 %v307
    %v1665 = vunpack.c.h.b16 %v307
    %v1666 = vunpack.c.l.b16 %v308
    %v1667 = vunpack.c.h.b16 %v308
    %v1668 = vunpack.c.l.b16 %v309
    %v1669 = vunpack.c.h.b16 %v309
    %v1670 = vunpack.c.l.b16 %v310
    %v1671 = vunpack.c.h.b16 %v310
    %v1672 = vunpack.c.l.b16 %v311
    %v1673 = vunpack.c.h.b16 %v311
    %v1674 = vunpack.c.l.b16 %v312
    %v1675 = vunpack.c.h.b16 %v312
    %v1676 = vunpack.c.l.b16 %v313
    %v1677 = vunpack.c.h.b16 %v313
    %v1678 = vunpack.c.l.b16 %v314
    %v1679 = vunpack.c.h.b16 %v314
    %v1680 = vunpack.c.l.b16 %v315
    %v1681 = vunpack.c.h.b16 %v315
    %v1682 = vunpack.c.l.b16 %v316
    %v1683 = vunpack.c.h.b16 %v316
    %v1684 = vunpack.c.l.b16 %v317
    %v1685 = vunpack.c.h.b16 %v317
    %v1686 = vunpack.c.l.b16 %v318
    %v1687 = vunpack.c.h.b16 %v318
    %v1688 = vunpack.c.l.b16 %v319
    %v1689 = vunpack.c.h.b16 %v319
    %v1690 = vunpack.c.l.b16 %v320
    %v1691 = vunpack.c.h.b16 %v320
    %v1692 = vunpack.c.l.b16 %v321
    %v1693 = vunpack.c.h.b16 %v321
    %v1694 = vunpack.c.l.b16 %v322
    %v1695 = vunpack.c.h.b16 %v322
    %v1696 = vunpack.c.l.b16 %v323
    %v1697 = vunpack.c.h.b16 %v323
    %v1698 = vunpack.c.l.b16 %v324
    %v1699 = vunpack.c.h.b16 %v324
    %v1700 = vunpack.c.l.b16 %v325
    %v1701 = vunpack.c.h.b16 %v325
    %v1702 = vunpack.c.l.b16 %v326
    %v1703 = vunpack.c.h.b16 %v326
    %v1704 = vunpack.c.l.b16 %v327
    %v1705 = vunpack.c.h.b16 %v327
    %v1706 = vunpack.c.l.b16 %v328
    %v1707 = vunpack.c.h.b16 %v328
    %v1708 = vunpack.c.l.b16 %v329
    %v1709 = vunpack.c.h.b16 %v329
    %v1710 = vunpack.c.l.b16 %v330
    %v1711 = vunpack.c.h.b16 %v330
    %v1712 = vunpack.c.l.b16 %v331
    %v1713 = vunpack.c.h.b16 %v331
    %v1714 = vunpack.c.l.b16 %v332
    %v1715 = vunpack.c.h.b16 %v332
    %v1716 = vunpack.c.l.b16 %v333
    %v1717 = vunpack.c.h.b16 %v333
    %v1718 = vunpack.c.l.b16 %v334
    %v1719 = vunpack.c.h.b16 %v334
    %v1720 = vunpack.c.l.b16 %v335
    %v1721 = vunpack.c.h.b16 %v335
    %v1722 = vunpack.c.l.b16 %v336
    %v1723 = vunpack.c.h.b16 %v336
    %v1724 = vunpack.c.l.b16 %v337
    %v1725 = vunpack.c.h.b16 %v337
    %v1726 = vunpack.c.l.b16 %v338
    %v1727 = vunpack.c.h.b16 %v338
    %v1728 = vunpack.c.l.b16 %v339
    %v1729 = vunpack.c.h.b16 %v339
    %v1730 = vunpack.c.l.b16 %v340
    %v1731 = vunpack.c.h.b16 %v340
    %v1732 = vunpack.c.l.b16 %v341
    %v1733 = vunpack.c.h.b16 %v341
    %v1734 = vunpack.c.l.b16 %v342
    %v1735 = vunpack.c.h.b16 %v342
    %v1736 = vunpack.c.l.b16 %v343
    %v1737 = vunpack.c.h.b16 %v343
    %v1738 = vunpack.c.l.b16 %v344
    %v1739 = vunpack.c.h.b16 %v344
    %v1740 = vunpack.c.l.b16 %v345
    %v1741 = vunpack.c.h.b16 %v345
    %v1742 = vunpack.c.l.b16 %v346
    %v1743 = vunpack.c.h.b16 %v346
    %v1744 = vunpack.c.l.b16 %v347
    %v1745 = vunpack.c.h.b16 %v347
    %v1746 = vunpack.c.l.b16 %v348
    %v1747 = vunpack.c.h.b16 %v348
    %v1748 = vunpack.c.l.b16 %v349
    %v1749 = vunpack.c.h.b16 %v349
    %v1750 = vunpack.c.l.b16 %v350
    %v1751 = vunpack.c.h.b16 %v350
    %v1752 = vunpack.c.l.b16 %v351
    %v1753 = vunpack.c.h.b16 %v351
    %v1754 = vunpack.c.l.b16 %v352
    %v1755 = vunpack.c.h.b16 %v352
    %v1756 = vunpack.c.l.b16 %v353
    %v1757 = vunpack.c.h.b16 %v353
    %v1758 = vunpack.c.l.b16 %v354
    %v1759 = vunpack.c.h.b16 %v354
    %v1760 = vunpack.c.l.b16 %v355
    %v1761 = vunpack.c.h.b16 %v355
    %v1762 = vunpack.c.l.b16 %v356
    %v1763 = vunpack.c.h.b16 %v356
    %v1764 = vunpack.c.l.b16 %v357
    %v1765 = vunpack.c.h.b16 %v357
    %v1766 = vunpack.c.l.b16 %v358
    %v1767 = vunpack.c.h.b16 %v358
    %v1768 = vunpack.c.l.b16 %v359
    %v1769 = vunpack.c.h.b16 %v359
    %v1770 = vunpack.c.l.b16 %v360
    %v1771 = vunpack.c.h.b16 %v360
    %v1772 = vunpack.c.l.b16 %v361
    %v1773 = vunpack.c.h.b16 %v361
    %v1774 = vunpack.c.l.b16 %v362
    %v1775 = vunpack.c.h.b16 %v362
    %v1776 = vunpack.c.l.b16 %v363
    %v1777 = vunpack.c.h.b16 %v363
    %v1778 = vunpack.c.l.b16 %v364
    %v1779 = vunpack.c.h.b16 %v364
    %v1780 = vunpack.c.l.b16 %v365
    %v1781 = vunpack.c.h.b16 %v365
    %v1782 = vunpack.c.l.b16 %v366
    %v1783 = vunpack.c.h.b16 %v366
    %v1784 = vunpack.c.l.b16 %v367
    %v1785 = vunpack.c.h.b16 %v367
    %v1786 = vunpack.c.l.b16 %v368
    %v1787 = vunpack.c.h.b16 %v368
    %v1788 = vunpack.c.l.b16 %v369
    %v1789 = vunpack.c.h.b16 %v369
    %v1790 = vunpack.c.l.b16 %v370
    %v1791 = vunpack.c.h.b16 %v370
    %v1792 = vunpack.c.l.b16 %v371
    %v1793 = vunpack.c.h.b16 %v371
    %v1794 = vunpack.c.l.b16 %v372
    %v1795 = vunpack.c.h.b16 %v372
    %v1796 = vunpack.c.l.b16 %v373
    %v1797 = vunpack.c.h.b16 %v373
    %v1798 = vunpack.c.l.b16 %v374
    %v1799 = vunpack.c.h.b16 %v374
    %v1800 = vunpack.c.l.b16 %v375
    %v1801 = vunpack.c.h.b16 %v375
    %v1802 = vunpack.c.l.b16 %v376
    %v1803 = vunpack.c.h.b16 %v376
    %v1804 = vunpack.c.l.b16 %v377
    %v1805 = vunpack.c.h.b16 %v377
    %v1806 = vunpack.c.l.b16 %v378
    %v1807 = vunpack.c.h.b16 %v378
    %v1808 = vunpack.c.l.b16 %v379
    %v1809 = vunpack.c.h.b16 %v379
    %v1810 = vunpack.c.l.b16 %v380
    %v1811 = vunpack.c.h.b16 %v380
    %v1812 = vunpack.c.l.b16 %v381
    %v1813 = vunpack.c.h.b16 %v381
    %v1814 = vunpack.c.l.b16 %v382
    %v1815 = vunpack.c.h.b16 %v382
    %v1816 = vunpack.c.l.b16 %v383
    %v1817 = vunpack.c.h.b16 %v383
    %v1818 = vunpack.c.l.b16 %v384
    %v1819 = vunpack.c.h.b16 %v384
    %v1820 = vunpack.c.l.b16 %v385
    %v1821 = vunpack.c.h.b16 %v385
    %v1822 = vunpack.c.l.b16 %v386
    %v1823 = vunpack.c.h.b16 %v386
    %v1824 = vunpack.c.l.b16 %v387
    %v1825 = vunpack.c.h.b16 %v387
    %v1826 = vunpack.c.l.b16 %v388
    %v1827 = vunpack.c.h.b16 %v388
    %v1828 = vunpack.c.l.b16 %v389
    %v1829 = vunpack.c.h.b16 %v389
    %v1830 = vunpack.c.l.b16 %v390
    %v1831 = vunpack.c.h.b16 %v390
    %v1832 = vunpack.c.l.b16 %v391
    %v1833 = vunpack.c.h.b16 %v391
    %v1834 = vunpack.c.l.b16 %v392
    %v1835 = vunpack.c.h.b16 %v392
    %v1836 = vunpack.c.l.b16 %v393
    %v1837 = vunpack.c.h.b16 %v393
    %v1838 = vunpack.c.l.b16 %v394
    %v1839 = vunpack.c.h.b16 %v394
    %v1840 = vunpack.c.l.b16 %v395
    %v1841 = vunpack.c.h.b16 %v395
    %v1842 = vunpack.c.l.b16 %v396
    %v1843 = vunpack.c.h.b16 %v396
    %v1844 = vunpack.c.l.b16 %v397
    %v1845 = vunpack.c.h.b16 %v397
    %v1846 = vunpack.c.l.b16 %v398
    %v1847 = vunpack.c.h.b16 %v398
    %v1848 = vunpack.c.l.b16 %v399
    %v1849 = vunpack.c.h.b16 %v399
    %v1850 = vunpack.c.l.b16 %v400
    %v1851 = vunpack.c.h.b16 %v400
    %v1852 = vunpack.c.l.b16 %v401
    %v1853 = vunpack.c.h.b16 %v401
    %v1854 = vunpack.c.l.b16 %v402
    %v1855 = vunpack.c.h.b16 %v402
    %v1856 = vunpack.c.l.b16 %v403
    %v1857 = vunpack.c.h.b16 %v403
    %v1858 = vunpack.c.l.b16 %v404
    %v1859 = vunpack.c.h.b16 %v404
    %v1860 = vunpack.c.l.b16 %v405
    %v1861 = vunpack.c.h.b16 %v405
    %v1862 = vunpack.c.l.b16 %v406
    %v1863 = vunpack.c.h.b16 %v406
    %v1864 = vunpack.c.l.b16 %v407
    %v1865 = vunpack.c.h.b16 %v407
    %v1866 = vunpack.c.l.b16 %v408
    %v1867 = vunpack.c.h.b16 %v408
    %v1868 = vunpack.c.l.b16 %v409
    %v1869 = vunpack.c.h.b16 %v409
    %v1870 = vunpack.c.l.b16 %v410
    %v1871 = vunpack.c.h.b16 %v410
    %v1872 = vunpack.c.l.b16 %v411
    %v1873 = vunpack.c.h.b16 %v411
    %v1874 = vunpack.c.l.b16 %v412
    %v1875 = vunpack.c.h.b16 %v412
    %v1876 = vunpack.c.l.b16 %v413
    %v1877 = vunpack.c.h.b16 %v413
    %v1878 = vunpack.c.l.b16 %v414
    %v1879 = vunpack.c.h.b16 %v414
    %v1880 = vunpack.c.l.b16 %v415
    %v1881 = vunpack.c.h.b16 %v415
    %v1882 = vunpack.c.l.b16 %v416
    %v1883 = vunpack.c.h.b16 %v416
    %v1884 = vunpack.c.l.b16 %v417
    %v1885 = vunpack.c.h.b16 %v417
    %v1886 = vunpack.c.l.b16 %v418
    %v1887 = vunpack.c.h.b16 %v418
    %v1888 = vunpack.c.l.b16 %v419
    %v1889 = vunpack.c.h.b16 %v419
    %v1890 = vunpack.c.l.b16 %v420
    %v1891 = vunpack.c.h.b16 %v420
    %v1892 = vunpack.c.l.b16 %v421
    %v1893 = vunpack.c.h.b16 %v421
    %v1894 = vunpack.c.l.b16 %v422
    %v1895 = vunpack.c.h.b16 %v422
    %v1896 = vunpack.c.l.b16 %v423
    %v1897 = vunpack.c.h.b16 %v423
    %v1898 = vunpack.c.l.b16 %v424
    %v1899 = vunpack.c.h.b16 %v424
    %v1900 = vunpack.c.l.b16 %v425
    %v1901 = vunpack.c.h.b16 %v425
    %v1902 = vunpack.c.l.b16 %v426
    %v1903 = vunpack.c.h.b16 %v426
    %v1904 = vunpack.c.l.b16 %v427
    %v1905 = vunpack.c.h.b16 %v427
    %v1906 = vunpack.c.l.b16 %v428
    %v1907 = vunpack.c.h.b16 %v428
    %v1908 = vunpack.c.l.b16 %v429
    %v1909 = vunpack.c.h.b16 %v429
    %v1910 = vunpack.c.l.b16 %v430
    %v1911 = vunpack.c.h.b16 %v430
    %v1912 = vunpack.c.l.b16 %v431
    %v1913 = vunpack.c.h.b16 %v431
    %v1914 = vunpack.c.l.b16 %v432
    %v1915 = vunpack.c.h.b16 %v432
    %v1916 = vunpack.c.l.b16 %v433
    %v1917 = vunpack.c.h.b16 %v433
    %v1918 = vunpack.c.l.b16 %v434
    %v1919 = vunpack.c.h.b16 %v434
    %v1920 = vunpack.c.l.b16 %v435
    %v1921 = vunpack.c.h.b16 %v435
    %v1922 = vunpack.c.l.b16 %v436
    %v1923 = vunpack.c.h.b16 %v436
    %v1924 = vunpack.c.l.b16 %v437
    %v1925 = vunpack.c.h.b16 %v437
    %v1926 = vunpack.c.l.b16 %v438
    %v1927 = vunpack.c.h.b16 %v438
    %v1928 = vunpack.c.l.b16 %v439
    %v1929 = vunpack.c.h.b16 %v439
    %v1930 = vunpack.c.l.b16 %v440
    %v1931 = vunpack.c.h.b16 %v440
    %v1932 = vunpack.c.l.b16 %v441
    %v1933 = vunpack.c.h.b16 %v441
    %v1934 = vunpack.c.l.b16 %v442
    %v1935 = vunpack.c.h.b16 %v442
    %v1936 = vunpack.c.l.b16 %v443
    %v1937 = vunpack.c.h.b16 %v443
    %v1938 = vunpack.c.l.b16 %v444
    %v1939 = vunpack.c.h.b16 %v444
    %v1940 = vunpack.c.l.b16 %v445
    %v1941 = vunpack.c.h.b16 %v445
    %v1942 = vunpack.c.l.b16 %v446
    %v1943 = vunpack.c.h.b16 %v446
    %v1944 = vunpack.c.l.b16 %v447
    %v1945 = vunpack.c.h.b16 %v447
    %v1946 = vunpack.c.l.b16 %v448
    %v1947 = vunpack.c.h.b16 %v448
    %v1948 = vunpack.c.l.b16 %v449
    %v1949 = vunpack.c.h.b16 %v449
    %v1950 = vunpack.c.l.b16 %v450
    %v1951 = vunpack.c.h.b16 %v450
    %v1952 = vunpack.c.l.b16 %v451
    %v1953 = vunpack.c.h.b16 %v451
    %v1954 = vunpack.c.l.b16 %v452
    %v1955 = vunpack.c.h.b16 %v452
    %v1956 = vunpack.c.l.b16 %v453
    %v1957 = vunpack.c.h.b16 %v453
    %v1958 = vunpack.c.l.b16 %v454
    %v1959 = vunpack.c.h.b16 %v454
    %v1960 = vunpack.c.l.b16 %v455
    %v1961 = vunpack.c.h.b16 %v455
    %v1962 = vunpack.c.l.b16 %v456
    %v1963 = vunpack.c.h.b16 %v456
    %v1964 = vunpack.c.l.b16 %v457
    %v1965 = vunpack.c.h.b16 %v457
    %v1966 = vunpack.c.l.b16 %v458
    %v1967 = vunpack.c.h.b16 %v458
    %v1968 = vunpack.c.l.b16 %v459
    %v1969 = vunpack.c.h.b16 %v459
    %v1970 = vunpack.c.l.b16 %v460
    %v1971 = vunpack.c.h.b16 %v460
    %v1972 = vunpack.c.l.b16 %v461
    %v1973 = vunpack.c.h.b16 %v461
    %v1974 = vunpack.c.l.b16 %v462
    %v1975 = vunpack.c.h.b16 %v462
    %v1976 = vunpack.c.l.b16 %v463
    %v1977 = vunpack.c.h.b16 %v463
    %v1978 = vunpack.c.l.b16 %v464
    %v1979 = vunpack.c.h.b16 %v464
    %v1980 = vunpack.c.l.b16 %v465
    %v1981 = vunpack.c.h.b16 %v465
    %v1982 = vunpack.c.l.b16 %v466
    %v1983 = vunpack.c.h.b16 %v466
    %v1984 = vunpack.c.l.b16 %v467
    %v1985 = vunpack.c.h.b16 %v467
    %v1986 = vunpack.c.l.b16 %v468
    %v1987 = vunpack.c.h.b16 %v468
    %v1988 = vunpack.c.l.b16 %v469
    %v1989 = vunpack.c.h.b16 %v469
    %v1990 = vunpack.c.l.b16 %v470
    %v1991 = vunpack.c.h.b16 %v470
    %v1992 = vunpack.c.l.b16 %v471
    %v1993 = vunpack.c.h.b16 %v471
    %v1994 = vunpack.c.l.b16 %v472
    %v1995 = vunpack.c.h.b16 %v472
    %v1996 = vunpack.c.l.b16 %v473
    %v1997 = vunpack.c.h.b16 %v473
    %v1998 = vunpack.c.l.b16 %v474
    %v1999 = vunpack.c.h.b16 %v474
    %v2000 = vunpack.c.l.b16 %v475
    %v2001 = vunpack.c.h.b16 %v475
    %v2002 = vunpack.c.l.b16 %v476
    %v2003 = vunpack.c.h.b16 %v476
    %v2004 = vunpack.c.l.b16 %v477
    %v2005 = vunpack.c.h.b16 %v477
    %v2006 = vunpack.c.l.b16 %v478
    %v2007 = vunpack.c.h.b16 %v478
    %v2008 = vunpack.c.l.b16 %v479
    %v2009 = vunpack.c.h.b16 %v479
    %v2010 = vunpack.c.l.b16 %v480
    %v2011 = vunpack.c.h.b16 %v480
    %v2012 = vunpack.c.l.b16 %v481
    %v2013 = vunpack.c.h.b16 %v481
    %v2014 = vunpack.c.l.b16 %v482
    %v2015 = vunpack.c.h.b16 %v482
    %v2016 = vunpack.c.l.b16 %v483
    %v2017 = vunpack.c.h.b16 %v483
    %v2018 = vunpack.c.l.b16 %v484
    %v2019 = vunpack.c.h.b16 %v484
    %v2020 = vunpack.c.l.b16 %v485
    %v2021 = vunpack.c.h.b16 %v485
    %v2022 = vunpack.c.l.b16 %v486
    %v2023 = vunpack.c.h.b16 %v486
    %v2024 = vunpack.c.l.b16 %v487
    %v2025 = vunpack.c.h.b16 %v487
    %v2026 = vunpack.c.l.b16 %v488
    %v2027 = vunpack.c.h.b16 %v488
    %v2028 = vunpack.c.l.b16 %v489
    %v2029 = vunpack.c.h.b16 %v489
    %v2030 = vunpack.c.l.b16 %v490
    %v2031 = vunpack.c.h.b16 %v490
    %v2032 = vunpack.c.l.b16 %v491
    %v2033 = vunpack.c.h.b16 %v491
    %v2034 = vunpack.c.l.b16 %v492
    %v2035 = vunpack.c.h.b16 %v492
    %v2036 = vunpack.c.l.b16 %v493
    %v2037 = vunpack.c.h.b16 %v493
    %v2038 = vunpack.c.l.b16 %v494
    %v2039 = vunpack.c.h.b16 %v494
    %v2040 = vunpack.c.l.b16 %v495
    %v2041 = vunpack.c.h.b16 %v495
    %v2042 = vunpack.c.l.b16 %v496
    %v2043 = vunpack.c.h.b16 %v496
    %v2044 = vunpack.c.l.b16 %v497
    %v2045 = vunpack.c.h.b16 %v497
    %v2046 = vunpack.c.l.b16 %v498
    %v2047 = vunpack.c.h.b16 %v498
    %v2048 = vunpack.c.l.b16 %v499
    %v2049 = vunpack.c.h.b16 %v499
    %v2050 = vunpack.c.l.b16 %v500
    %v2051 = vunpack.c.h.b16 %v500
    %v2052 = vunpack.c.l.b16 %v501
    %v2053 = vunpack.c.h.b16 %v501
    %v2054 = vunpack.c.l.b16 %v502
    %v2055 = vunpack.c.h.b16 %v502
    %v2056 = vunpack.c.l.b16 %v503
    %v2057 = vunpack.c.h.b16 %v503
    %v2058 = vunpack.c.l.b16 %v504
    %v2059 = vunpack.c.h.b16 %v504
    %v2060 = vunpack.c.l.b16 %v505
    %v2061 = vunpack.c.h.b16 %v505
    %v2062 = vunpack.c.l.b16 %v506
    %v2063 = vunpack.c.h.b16 %v506
    %v2064 = vunpack.c.l.b16 %v507
    %v2065 = vunpack.c.h.b16 %v507
    %v2066 = vunpack.c.l.b16 %v508
    %v2067 = vunpack.c.h.b16 %v508
    %v2068 = vunpack.c.l.b16 %v509
    %v2069 = vunpack.c.h.b16 %v509
    %v2070 = vunpack.c.l.b16 %v510
    %v2071 = vunpack.c.h.b16 %v510
    %v2072 = vunpack.c.l.b16 %v511
    %v2073 = vunpack.c.h.b16 %v511
    %v2074 = vunpack.c.l.b16 %v512
    %v2075 = vunpack.c.h.b16 %v512
    %v2076 = vunpack.c.l.b16 %v513
    %v2077 = vunpack.c.h.b16 %v513
    %v2078 = vunpack.c.l.b16 %v514
    %v2079 = vunpack.c.h.b16 %v514
    %v2080 = vunpack.c.l.b16 %v515
    %v2081 = vunpack.c.h.b16 %v515
    %v2082 = vunpack.c.l.b16 %v516
    %v2083 = vunpack.c.h.b16 %v516
    %v2084 = vunpack.c.l.b16 %v517
    %v2085 = vunpack.c.h.b16 %v517
    %v2086 = vunpack.c.l.b16 %v518
    %v2087 = vunpack.c.h.b16 %v518
    %v2088 = vunpack.c.l.b16 %v519
    %v2089 = vunpack.c.h.b16 %v519
    %v2090 = vunpack.c.l.b16 %v520
    %v2091 = vunpack.c.h.b16 %v520
    %v2092 = vunpack.c.l.b16 %v521
    %v2093 = vunpack.c.h.b16 %v521
    %v2094 = vunpack.c.l.b16 %v522
    %v2095 = vunpack.c.h.b16 %v522
    %v2096 = vunpack.c.l.b16 %v523
    %v2097 = vunpack.c.h.b16 %v523
    %v2098 = vunpack.c.l.b16 %v524
    %v2099 = vunpack.c.h.b16 %v524
    %v2100 = vunpack.c.l.b16 %v525
    %v2101 = vunpack.c.h.b16 %v525
    %v2102 = vunpack.c.l.b16 %v526
    %v2103 = vunpack.c.h.b16 %v526
    %v2104 = vunpack.c.l.b16 %v527
    %v2105 = vunpack.c.h.b16 %v527
    %v2106 = vunpack.c.l.b16 %v528
    %v2107 = vunpack.c.h.b16 %v528
    %v2108 = vunpack.c.l.b16 %v529
    %v2109 = vunpack.c.h.b16 %v529
    %v2110 = vunpack.c.l.b16 %v530
    %v2111 = vunpack.c.h.b16 %v530
    %v2112 = vunpack.c.l.b16 %v531
    %v2113 = vunpack.c.h.b16 %v531
    %v2114 = vunpack.c.l.b16 %v532
    %v2115 = vunpack.c.h.b16 %v532
    %v2116 = vunpack.c.l.b16 %v533
    %v2117 = vunpack.c.h.b16 %v533
    %v2118 = vunpack.c.l.b16 %v534
    %v2119 = vunpack.c.h.b16 %v534
    %v2120 = vunpack.c.l.b16 %v535
    %v2121 = vunpack.c.h.b16 %v535
    %v2122 = vunpack.c.l.b16 %v536
    %v2123 = vunpack.c.h.b16 %v536
    %v2124 = vunpack.c.l.b16 %v537
    %v2125 = vunpack.c.h.b16 %v537
    %v2126 = vunpack.c.l.b16 %v538
    %v2127 = vunpack.c.h.b16 %v538
    %v2128 = vunpack.c.l.b16 %v539
    %v2129 = vunpack.c.h.b16 %v539
    %v2130 = vunpack.c.l.b16 %v540
    %v2131 = vunpack.c.h.b16 %v540
    %v2132 = vunpack.c.l.b16 %v541
    %v2133 = vunpack.c.h.b16 %v541
    %v2134 = vunpack.c.l.b16 %v542
    %v2135 = vunpack.c.h.b16 %v542
    %v2136 = vunpack.c.l.b16 %v543
    %v2137 = vunpack.c.h.b16 %v543
    %v2138 = vunpack.c.l.b16 %v544
    %v2139 = vunpack.c.h.b16 %v544
    %v2140 = vunpack.c.l.b16 %v545
    %v2141 = vunpack.c.h.b16 %v545
    %v2142 = vunpack.c.l.b16 %v546
    %v2143 = vunpack.c.h.b16 %v546
    %v2144 = vunpack.c.l.b16 %v547
    %v2145 = vunpack.c.h.b16 %v547
    %v2146 = vunpack.c.l.b16 %v548
    %v2147 = vunpack.c.h.b16 %v548
    %v2148 = vunpack.c.l.b16 %v549
    %v2149 = vunpack.c.h.b16 %v549
    %v2150 = vunpack.c.l.b16 %v550
    %v2151 = vunpack.c.h.b16 %v550
    %v2152 = vunpack.c.l.b16 %v551
    %v2153 = vunpack.c.h.b16 %v551
    %v2154 = vunpack.c.l.b16 %v552
    %v2155 = vunpack.c.h.b16 %v552
    %v2156 = vunpack.c.l.b16 %v553
    %v2157 = vunpack.c.h.b16 %v553
    %v2158 = vunpack.c.l.b16 %v554
    %v2159 = vunpack.c.h.b16 %v554
    %v2160 = vunpack.c.l.b16 %v555
    %v2161 = vunpack.c.h.b16 %v555
    %v2162 = vpack.c.b16 %v1146, %v1138
    %v2163 = vpack.c.b16 %v1147, %v1139
    %v2164 = vpack.c.b16 %v1148, %v1140
    %v2165 = vpack.c.b16 %v1149, %v1141
    %v2166 = vpack.c.b16 %v1150, %v1142
    %v2167 = vpack.c.b16 %v1151, %v1143
    %v2168 = vpack.c.b16 %v1152, %v1144
    %v2169 = vpack.c.b16 %v1153, %v1145
    %v2170 = vpack.c.b16 %v1162, %v1154
    %v2171 = vpack.c.b16 %v1163, %v1155
    %v2172 = vpack.c.b16 %v1164, %v1156
    %v2173 = vpack.c.b16 %v1165, %v1157
    %v2174 = vpack.c.b16 %v1166, %v1158
    %v2175 = vpack.c.b16 %v1167, %v1159
    %v2176 = vpack.c.b16 %v1168, %v1160
    %v2177 = vpack.c.b16 %v1169, %v1161
    %v2178 = vpack.c.b16 %v1178, %v1170
    %v2179 = vpack.c.b16 %v1179, %v1171
    %v2180 = vpack.c.b16 %v1180, %v1172
    %v2181 = vpack.c.b16 %v1181, %v1173
    %v2182 = vpack.c.b16 %v1182, %v1174
    %v2183 = vpack.c.b16 %v1183, %v1175
    %v2184 = vpack.c.b16 %v1184, %v1176
    %v2185 = vpack.c.b16 %v1185, %v1177
    %v2186 = vpack.c.b16 %v1194, %v1186
    %v2187 = vpack.c.b16 %v1195, %v1187
    %v2188 = vpack.c.b16 %v1196, %v1188
    %v2189 = vpack.c.b16 %v1197, %v1189
    %v2190 = vpack.c.b16 %v1198, %v1190
    %v2191 = vpack.c.b16 %v1199, %v1191
    %v2192 = vpack.c.b16 %v1200, %v1192
    %v2193 = vpack.c.b16 %v1201, %v1193
    %v2194 = vpack.c.b16 %v1210, %v1202
    %v2195 = vpack.c.b16 %v1211, %v1203
    %v2196 = vpack.c.b16 %v1212, %v1204
    %v2197 = vpack.c.b16 %v1213, %v1205
    %v2198 = vpack.c.b16 %v1214, %v1206
    %v2199 = vpack.c.b16 %v1215, %v1207
    %v2200 = vpack.c.b16 %v1216, %v1208
    %v2201 = vpack.c.b16 %v1217, %v1209
    %v2202 = vpack.c.b16 %v1226, %v1218
    %v2203 = vpack.c.b16 %v1227, %v1219
    %v2204 = vpack.c.b16 %v1228, %v1220
    %v2205 = vpack.c.b16 %v1229, %v1221
    %v2206 = vpack.c.b16 %v1230, %v1222
    %v2207 = vpack.c.b16 %v1231, %v1223
    %v2208 = vpack.c.b16 %v1232, %v1224
    %v2209 = vpack.c.b16 %v1233, %v1225
    %v2210 = vpack.c.b16 %v1242, %v1234
    %v2211 = vpack.c.b16 %v1243, %v1235
    %v2212 = vpack.c.b16 %v1244, %v1236
    %v2213 = vpack.c.b16 %v1245, %v1237
    %v2214 = vpack.c.b16 %v1246, %v1238
    %v2215 = vpack.c.b16 %v1247, %v1239
    %v2216 = vpack.c.b16 %v1248, %v1240
    %v2217 = vpack.c.b16 %v1249, %v1241
    %v2218 = vpack.c.b16 %v1258, %v1250
    %v2219 = vpack.c.b16 %v1259, %v1251
    %v2220 = vpack.c.b16 %v1260, %v1252
    %v2221 = vpack.c.b16 %v1261, %v1253
    %v2222 = vpack.c.b16 %v1262, %v1254
    %v2223 = vpack.c.b16 %v1263, %v1255
    %v2224 = vpack.c.b16 %v1264, %v1256
    %v2225 = vpack.c.b16 %v1265, %v1257
    %v2226 = vpack.c.b16 %v1274, %v1266
    %v2227 = vpack.c.b16 %v1275, %v1267
    %v2228 = vpack.c.b16 %v1276, %v1268
    %v2229 = vpack.c.b16 %v1277, %v1269
    %v2230 = vpack.c.b16 %v1278, %v1270
    %v2231 = vpack.c.b16 %v1279, %v1271
    %v2232 = vpack.c.b16 %v1280, %v1272
    %v2233 = vpack.c.b16 %v1281, %v1273
    %v2234 = vpack.c.b16 %v1290, %v1282
    %v2235 = vpack.c.b16 %v1291, %v1283
    %v2236 = vpack.c.b16 %v1292, %v1284
    %v2237 = vpack.c.b16 %v1293, %v1285
    %v2238 = vpack.c.b16 %v1294, %v1286
    %v2239 = vpack.c.b16 %v1295, %v1287
    %v2240 = vpack.c.b16 %v1296, %v1288
    %v2241 = vpack.c.b16 %v1297, %v1289
    %v2242 = vpack.c.b16 %v1306, %v1298
    %v2243 = vpack.c.b16 %v1307, %v1299
    %v2244 = vpack.c.b16 %v1308, %v1300
    %v2245 = vpack.c.b16 %v1309, %v1301
    %v2246 = vpack.c.b16 %v1310, %v1302
    %v2247 = vpack.c.b16 %v1311, %v1303
    %v2248 = vpack.c.b16 %v1312, %v1304
    %v2249 = vpack.c.b16 %v1313, %v1305
    %v2250 = vpack.c.b16 %v1322, %v1314
    %v2251 = vpack.c.b16 %v1323, %v1315
    %v2252 = vpack.c.b16 %v1324, %v1316
    %v2253 = vpack.c.b16 %v1325, %v1317
    %v2254 = vpack.c.b16 %v1326, %v1318
    %v2255 = vpack.c.b16 %v1327, %v1319
    %v2256 = vpack.c.b16 %v1328, %v1320
    %v2257 = vpack.c.b16 %v1329, %v1321
    %v2258 = vpack.c.b16 %v1338, %v1330
    %v2259 = vpack.c.b16 %v1339, %v1331
    %v2260 = vpack.c.b16 %v1340, %v1332
    %v2261 = vpack.c.b16 %v1341, %v1333
    %v2262 = vpack.c.b16 %v1342, %v1334
    %v2263 = vpack.c.b16 %v1343, %v1335
    %v2264 = vpack.c.b16 %v1344, %v1336
    %v2265 = vpack.c.b16 %v1345, %v1337
    %v2266 = vpack.c.b16 %v1354, %v1346
    %v2267 = vpack.c.b16 %v1355, %v1347
    %v2268 = vpack.c.b16 %v1356, %v1348
    %v2269 = vpack.c.b16 %v1357, %v1349
    %v2270 = vpack.c.b16 %v1358, %v1350
    %v2271 = vpack.c.b16 %v1359, %v1351
    %v2272 = vpack.c.b16 %v1360, %v1352
    %v2273 = vpack.c.b16 %v1361, %v1353
    %v2274 = vpack.c.b16 %v1370, %v1362
    %v2275 = vpack.c.b16 %v1371, %v1363
    %v2276 = vpack.c.b16 %v1372, %v1364
    %v2277 = vpack.c.b16 %v1373, %v1365
    %v2278 = vpack.c.b16 %v1374, %v1366
    %v2279 = vpack.c.b16 %v1375, %v1367
    %v2280 = vpack.c.b16 %v1376, %v1368
    %v2281 = vpack.c.b16 %v1377, %v1369
    %v2282 = vpack.c.b16 %v1386, %v1378
    %v2283 = vpack.c.b16 %v1387, %v1379
    %v2284 = vpack.c.b16 %v1388, %v1380
    %v2285 = vpack.c.b16 %v1389, %v1381
    %v2286 = vpack.c.b16 %v1390, %v1382
    %v2287 = vpack.c.b16 %v1391, %v1383
    %v2288 = vpack.c.b16 %v1392, %v1384
    %v2289 = vpack.c.b16 %v1393, %v1385
    %v2290 = vpack.c.b16 %v1402, %v1394
    %v2291 = vpack.c.b16 %v1403, %v1395
    %v2292 = vpack.c.b16 %v1404, %v1396
    %v2293 = vpack.c.b16 %v1405, %v1397
    %v2294 = vpack.c.b16 %v1406, %v1398
    %v2295 = vpack.c.b16 %v1407, %v1399
    %v2296 = vpack.c.b16 %v1408, %v1400
    %v2297 = vpack.c.b16 %v1409, %v1401
    %v2298 = vpack.c.b16 %v1418, %v1410
    %v2299 = vpack.c.b16 %v1419, %v1411
    %v2300 = vpack.c.b16 %v1420, %v1412
    %v2301 = vpack.c.b16 %v1421, %v1413
    %v2302 = vpack.c.b16 %v1422, %v1414
    %v2303 = vpack.c.b16 %v1423, %v1415
    %v2304 = vpack.c.b16 %v1424, %v1416
    %v2305 = vpack.c.b16 %v1425, %v1417
    %v2306 = vpack.c.b16 %v1434, %v1426
    %v2307 = vpack.c.b16 %v1435, %v1427
    %v2308 = vpack.c.b16 %v1436, %v1428
    %v2309 = vpack.c.b16 %v1437, %v1429
    %v2310 = vpack.c.b16 %v1438, %v1430
    %v2311 = vpack.c.b16 %v1439, %v1431
    %v2312 = vpack.c.b16 %v1440, %v1432
    %v2313 = vpack.c.b16 %v1441, %v1433
    %v2314 = vpack.c.b16 %v1450, %v1442
    %v2315 = vpack.c.b16 %v1451, %v1443
    %v2316 = vpack.c.b16 %v1452, %v1444
    %v2317 = vpack.c.b16 %v1453, %v1445
    %v2318 = vpack.c.b16 %v1454, %v1446
    %v2319 = vpack.c.b16 %v1455, %v1447
    %v2320 = vpack.c.b16 %v1456, %v1448
    %v2321 = vpack.c.b16 %v1457, %v1449
    %v2322 = vpack.c.b16 %v1466, %v1458
    %v2323 = vpack.c.b16 %v1467, %v1459
    %v2324 = vpack.c.b16 %v1468, %v1460
    %v2325 = vpack.c.b16 %v1469, %v1461
    %v2326 = vpack.c.b16 %v1470, %v1462
    %v2327 = vpack.c.b16 %v1471, %v1463
    %v2328 = vpack.c.b16 %v1472, %v1464
    %v2329 = vpack.c.b16 %v1473, %v1465
    %v2330 = vpack.c.b16 %v1482, %v1474
    %v2331 = vpack.c.b16 %v1483, %v1475
    %v2332 = vpack.c.b16 %v1484, %v1476
    %v2333 = vpack.c.b16 %v1485, %v1477
    %v2334 = vpack.c.b16 %v1486, %v1478
    %v2335 = vpack.c.b16 %v1487, %v1479
    %v2336 = vpack.c.b16 %v1488, %v1480
    %v2337 = vpack.c.b16 %v1489, %v1481
    %v2338 = vpack.c.b16 %v1498, %v1490
    %v2339 = vpack.c.b16 %v1499, %v1491
    %v2340 = vpack.c.b16 %v1500, %v1492
    %v2341 = vpack.c.b16 %v1501, %v1493
    %v2342 = vpack.c.b16 %v1502, %v1494
    %v2343 = vpack.c.b16 %v1503, %v1495
    %v2344 = vpack.c.b16 %v1504, %v1496
    %v2345 = vpack.c.b16 %v1505, %v1497
    %v2346 = vpack.c.b16 %v1514, %v1506
    %v2347 = vpack.c.b16 %v1515, %v1507
    %v2348 = vpack.c.b16 %v1516, %v1508
    %v2349 = vpack.c.b16 %v1517, %v1509
    %v2350 = vpack.c.b16 %v1518, %v1510
    %v2351 = vpack.c.b16 %v1519, %v1511
    %v2352 = vpack.c.b16 %v1520, %v1512
    %v2353 = vpack.c.b16 %v1521, %v1513
    %v2354 = vpack.c.b16 %v1530, %v1522
    %v2355 = vpack.c.b16 %v1531, %v1523
    %v2356 = vpack.c.b16 %v1532, %v1524
    %v2357 = vpack.c.b16 %v1533, %v1525
    %v2358 = vpack.c.b16 %v1534, %v1526
    %v2359 = vpack.c.b16 %v1535, %v1527
    %v2360 = vpack.c.b16 %v1536, %v1528
    %v2361 = vpack.c.b16 %v1537, %v1529
    %v2362 = vpack.c.b16 %v1546, %v1538
    %v2363 = vpack.c.b16 %v1547, %v1539
    %v2364 = vpack.c.b16 %v1548, %v1540
    %v2365 = vpack.c.b16 %v1549, %v1541
    %v2366 = vpack.c.b16 %v1550, %v1542
    %v2367 = vpack.c.b16 %v1551, %v1543
    %v2368 = vpack.c.b16 %v1552, %v1544
    %v2369 = vpack.c.b16 %v1553, %v1545
    %v2370 = vpack.c.b16 %v1562, %v1554
    %v2371 = vpack.c.b16 %v1563, %v1555
    %v2372 = vpack.c.b16 %v1564, %v1556
    %v2373 = vpack.c.b16 %v1565, %v1557
    %v2374 = vpack.c.b16 %v1566, %v1558
    %v2375 = vpack.c.b16 %v1567, %v1559
    %v2376 = vpack.c.b16 %v1568, %v1560
    %v2377 = vpack.c.b16 %v1569, %v1561
    %v2378 = vpack.c.b16 %v1578, %v1570
    %v2379 = vpack.c.b16 %v1579, %v1571
    %v2380 = vpack.c.b16 %v1580, %v1572
    %v2381 = vpack.c.b16 %v1581, %v1573
    %v2382 = vpack.c.b16 %v1582, %v1574
    %v2383 = vpack.c.b16 %v1583, %v1575
    %v2384 = vpack.c.b16 %v1584, %v1576
    %v2385 = vpack.c.b16 %v1585, %v1577
    %v2386 = vpack.c.b16 %v1594, %v1586
    %v2387 = vpack.c.b16 %v1595, %v1587
    %v2388 = vpack.c.b16 %v1596, %v1588
    %v2389 = vpack.c.b16 %v1597, %v1589
    %v2390 = vpack.c.b16 %v1598, %v1590
    %v2391 = vpack.c.b16 %v1599, %v1591
    %v2392 = vpack.c.b16 %v1600, %v1592
    %v2393 = vpack.c.b16 %v1601, %v1593
    %v2394 = vpack.c.b16 %v1610, %v1602
    %v2395 = vpack.c.b16 %v1611, %v1603
    %v2396 = vpack.c.b16 %v1612, %v1604
    %v2397 = vpack.c.b16 %v1613, %v1605
    %v2398 = vpack.c.b16 %v1614, %v1606
    %v2399 = vpack.c.b16 %v1615, %v1607
    %v2400 = vpack.c.b16 %v1616, %v1608
    %v2401 = vpack.c.b16 %v1617, %v1609
    %v2402 = vpack.c.b16 %v1626, %v1618
    %v2403 = vpack.c.b16 %v1627, %v1619
    %v2404 = vpack.c.b16 %v1628, %v1620
    %v2405 = vpack.c.b16 %v1629, %v1621
    %v2406 = vpack.c.b16 %v1630, %v1622
    %v2407 = vpack.c.b16 %v1631, %v1623
    %v2408 = vpack.c.b16 %v1632, %v1624
    %v2409 = vpack.c.b16 %v1633, %v1625
    %v2410 = vpack.c.b16 %v1642, %v1634
    %v2411 = vpack.c.b16 %v1643, %v1635
    %v2412 = vpack.c.b16 %v1644, %v1636
    %v2413 = vpack.c.b16 %v1645, %v1637
    %v2414 = vpack.c.b16 %v1646, %v1638
    %v2415 = vpack.c.b16 %v1647, %v1639
    %v2416 = vpack.c.b16 %v1648, %v1640
    %v2417 = vpack.c.b16 %v1649, %v1641
    %v2418 = vpack.c.b16 %v1658, %v1650
    %v2419 = vpack.c.b16 %v1659, %v1651
    %v2420 = vpack.c.b16 %v1660, %v1652
    %v2421 = vpack.c.b16 %v1661, %v1653
    %v2422 = vpack.c.b16 %v1662, %v1654
    %v2423 = vpack.c.b16 %v1663, %v1655
    %v2424 = vpack.c.b16 %v1664, %v1656
    %v2425 = vpack.c.b16 %v1665, %v1657
    %v2426 = vpack.c.b16 %v1674, %v1666
    %v2427 = vpack.c.b16 %v1675, %v1667
    %v2428 = vpack.c.b16 %v1676, %v1668
    %v2429 = vpack.c.b16 %v1677, %v1669
    %v2430 = vpack.c.b16 %v1678, %v1670
    %v2431 = vpack.c.b16 %v1679, %v1671
    %v2432 = vpack.c.b16 %v1680, %v1672
    %v2433 = vpack.c.b16 %v1681, %v1673
    %v2434 = vpack.c.b16 %v1690, %v1682
    %v2435 = vpack.c.b16 %v1691, %v1683
    %v2436 = vpack.c.b16 %v1692, %v1684
    %v2437 = vpack.c.b16 %v1693, %v1685
    %v2438 = vpack.c.b16 %v1694, %v1686
    %v2439 = vpack.c.b16 %v1695, %v1687
    %v2440 = vpack.c.b16 %v1696, %v1688
    %v2441 = vpack.c.b16 %v1697, %v1689
    %v2442 = vpack.c.b16 %v1706, %v1698
    %v2443 = vpack.c.b16 %v1707, %v1699
    %v2444 = vpack.c.b16 %v1708, %v1700
    %v2445 = vpack.c.b16 %v1709, %v1701
    %v2446 = vpack.c.b16 %v1710, %v1702
    %v2447 = vpack.c.b16 %v1711, %v1703
    %v2448 = vpack.c.b16 %v1712, %v1704
    %v2449 = vpack.c.b16 %v1713, %v1705
    %v2450 = vpack.c.b16 %v1722, %v1714
    %v2451 = vpack.c.b16 %v1723, %v1715
    %v2452 = vpack.c.b16 %v1724, %v1716
    %v2453 = vpack.c.b16 %v1725, %v1717
    %v2454 = vpack.c.b16 %v1726, %v1718
    %v2455 = vpack.c.b16 %v1727, %v1719
    %v2456 = vpack.c.b16 %v1728, %v1720
    %v2457 = vpack.c.b16 %v1729, %v1721
    %v2458 = vpack.c.b16 %v1738, %v1730
    %v2459 = vpack.c.b16 %v1739, %v1731
    %v2460 = vpack.c.b16 %v1740, %v1732
    %v2461 = vpack.c.b16 %v1741, %v1733
    %v2462 = vpack.c.b16 %v1742, %v1734
    %v2463 = vpack.c.b16 %v1743, %v1735
    %v2464 = vpack.c.b16 %v1744, %v1736
    %v2465 = vpack.c.b16 %v1745, %v1737
    %v2466 = vpack.c.b16 %v1754, %v1746
    %v2467 = vpack.c.b16 %v1755, %v1747
    %v2468 = vpack.c.b16 %v1756, %v1748
    %v2469 = vpack.c.b16 %v1757, %v1749
    %v2470 = vpack.c.b16 %v1758, %v1750
    %v2471 = vpack.c.b16 %v1759, %v1751
    %v2472 = vpack.c.b16 %v1760, %v1752
    %v2473 = vpack.c.b16 %v1761, %v1753
    %v2474 = vpack.c.b16 %v1770, %v1762
    %v2475 = vpack.c.b16 %v1771, %v1763
    %v2476 = vpack.c.b16 %v1772, %v1764
    %v2477 = vpack.c.b16 %v1773, %v1765
    %v2478 = vpack.c.b16 %v1774, %v1766
    %v2479 = vpack.c.b16 %v1775, %v1767
    %v2480 = vpack.c.b16 %v1776, %v1768
    %v2481 = vpack.c.b16 %v1777, %v1769
    %v2482 = vpack.c.b16 %v1786, %v1778
    %v2483 = vpack.c.b16 %v1787, %v1779
    %v2484 = vpack.c.b16 %v1788, %v1780
    %v2485 = vpack.c.b16 %v1789, %v1781
    %v2486 = vpack.c.b16 %v1790, %v1782
    %v2487 = vpack.c.b16 %v1791, %v1783
    %v2488 = vpack.c.b16 %v1792, %v1784
    %v2489 = vpack.c.b16 %v1793, %v1785
    %v2490 = vpack.c.b16 %v1802, %v1794
    %v2491 = vpack.c.b16 %v1803, %v1795
    %v2492 = vpack.c.b16 %v1804, %v1796
    %v2493 = vpack.c.b16 %v1805, %v1797
    %v2494 = vpack.c.b16 %v1806, %v1798
    %v2495 = vpack.c.b16 %v1807, %v1799
    %v2496 = vpack.c.b16 %v1808, %v1800
    %v2497 = vpack.c.b16 %v1809, %v1801
    %v2498 = vpack.c.b16 %v1818, %v1810
    %v2499 = vpack.c.b16 %v1819, %v1811
    %v2500 = vpack.c.b16 %v1820, %v1812
    %v2501 = vpack.c.b16 %v1821, %v1813
    %v2502 = vpack.c.b16 %v1822, %v1814
    %v2503 = vpack.c.b16 %v1823, %v1815
    %v2504 = vpack.c.b16 %v1824, %v1816
    %v2505 = vpack.c.b16 %v1825, %v1817
    %v2506 = vpack.c.b16 %v1834, %v1826
    %v2507 = vpack.c.b16 %v1835, %v1827
    %v2508 = vpack.c.b16 %v1836, %v1828
    %v2509 = vpack.c.b16 %v1837, %v1829
    %v2510 = vpack.c.b16 %v1838, %v1830
    %v2511 = vpack.c.b16 %v1839, %v1831
    %v2512 = vpack.c.b16 %v1840, %v1832
    %v2513 = vpack.c.b16 %v1841, %v1833
    %v2514 = vpack.c.b16 %v1850, %v1842
    %v2515 = vpack.c.b16 %v1851, %v1843
    %v2516 = vpack.c.b16 %v1852, %v1844
    %v2517 = vpack.c.b16 %v1853, %v1845
    %v2518 = vpack.c.b16 %v1854, %v1846
    %v2519 = vpack.c.b16 %v1855, %v1847
    %v2520 = vpack.c.b16 %v1856, %v1848
    %v2521 = vpack.c.b16 %v1857, %v1849
    %v2522 = vpack.c.b16 %v1866, %v1858
    %v2523 = vpack.c.b16 %v1867, %v1859
    %v2524 = vpack.c.b16 %v1868, %v1860
    %v2525 = vpack.c.b16 %v1869, %v1861
    %v2526 = vpack.c.b16 %v1870, %v1862
    %v2527 = vpack.c.b16 %v1871, %v1863
    %v2528 = vpack.c.b16 %v1872, %v1864
    %v2529 = vpack.c.b16 %v1873, %v1865
    %v2530 = vpack.c.b16 %v1882, %v1874
    %v2531 = vpack.c.b16 %v1883, %v1875
    %v2532 = vpack.c.b16 %v1884, %v1876
    %v2533 = vpack.c.b16 %v1885, %v1877
    %v2534 = vpack.c.b16 %v1886, %v1878
    %v2535 = vpack.c.b16 %v1887, %v1879
    %v2536 = vpack.c.b16 %v1888, %v1880
    %v2537 = vpack.c.b16 %v1889, %v1881
    %v2538 = vpack.c.b16 %v1898, %v1890
    %v2539 = vpack.c.b16 %v1899, %v1891
    %v2540 = vpack.c.b16 %v1900, %v1892
    %v2541 = vpack.c.b16 %v1901, %v1893
    %v2542 = vpack.c.b16 %v1902, %v1894
    %v2543 = vpack.c.b16 %v1903, %v1895
    %v2544 = vpack.c.b16 %v1904, %v1896
    %v2545 = vpack.c.b16 %v1905, %v1897
    %v2546 = vpack.c.b16 %v1914, %v1906
    %v2547 = vpack.c.b16 %v1915, %v1907
    %v2548 = vpack.c.b16 %v1916, %v1908
    %v2549 = vpack.c.b16 %v1917, %v1909
    %v2550 = vpack.c.b16 %v1918, %v1910
    %v2551 = vpack.c.b16 %v1919, %v1911
    %v2552 = vpack.c.b16 %v1920, %v1912
    %v2553 = vpack.c.b16 %v1921, %v1913
    %v2554 = vpack.c.b16 %v1930, %v1922
    %v2555 = vpack.c.b16 %v1931, %v1923
    %v2556 = vpack.c.b16 %v1932, %v1924
    %v2557 = vpack.c.b16 %v1933, %v1925
    %v2558 = vpack.c.b16 %v1934, %v1926
    %v2559 = vpack.c.b16 %v1935, %v1927
    %v2560 = vpack.c.b16 %v1936, %v1928
    %v2561 = vpack.c.b16 %v1937, %v1929
    %v2562 = vpack.c.b16 %v1946, %v1938
    %v2563 = vpack.c.b16 %v1947, %v1939
    %v2564 = vpack.c.b16 %v1948, %v1940
    %v2565 = vpack.c.b16 %v1949, %v1941
    %v2566 = vpack.c.b16 %v1950, %v1942
    %v2567 = vpack.c.b16 %v1951, %v1943
    %v2568 = vpack.c.b16 %v1952, %v1944
    %v2569 = vpack.c.b16 %v1953, %v1945
    %v2570 = vpack.c.b16 %v1962, %v1954
    %v2571 = vpack.c.b16 %v1963, %v1955
    %v2572 = vpack.c.b16 %v1964, %v1956
    %v2573 = vpack.c.b16 %v1965, %v1957
    %v2574 = vpack.c.b16 %v1966, %v1958
    %v2575 = vpack.c.b16 %v1967, %v1959
    %v2576 = vpack.c.b16 %v1968, %v1960
    %v2577 = vpack.c.b16 %v1969, %v1961
    %v2578 = vpack.c.b16 %v1978, %v1970
    %v2579 = vpack.c.b16 %v1979, %v1971
    %v2580 = vpack.c.b16 %v1980, %v1972
    %v2581 = vpack.c.b16 %v1981, %v1973
    %v2582 = vpack.c.b16 %v1982, %v1974
    %v2583 = vpack.c.b16 %v1983, %v1975
    %v2584 = vpack.c.b16 %v1984, %v1976
    %v2585 = vpack.c.b16 %v1985, %v1977
    %v2586 = vpack.c.b16 %v1994, %v1986
    %v2587 = vpack.c.b16 %v1995, %v1987
    %v2588 = vpack.c.b16 %v1996, %v1988
    %v2589 = vpack.c.b16 %v1997, %v1989
    %v2590 = vpack.c.b16 %v1998, %v1990
    %v2591 = vpack.c.b16 %v1999, %v1991
    %v2592 = vpack.c.b16 %v2000, %v1992
    %v2593 = vpack.c.b16 %v2001, %v1993
    %v2594 = vpack.c.b16 %v2010, %v2002
    %v2595 = vpack.c.b16 %v2011, %v2003
    %v2596 = vpack.c.b16 %v2012, %v2004
    %v2597 = vpack.c.b16 %v2013, %v2005
    %v2598 = vpack.c.b16 %v2014, %v2006
    %v2599 = vpack.c.b16 %v2015, %v2007
    %v2600 = vpack.c.b16 %v2016, %v2008
    %v2601 = vpack.c.b16 %v2017, %v2009
    %v2602 = vpack.c.b16 %v2026, %v2018
    %v2603 = vpack.c.b16 %v2027, %v2019
    %v2604 = vpack.c.b16 %v2028, %v2020
    %v2605 = vpack.c.b16 %v2029, %v2021
    %v2606 = vpack.c.b16 %v2030, %v2022
    %v2607 = vpack.c.b16 %v2031, %v2023
    %v2608 = vpack.c.b16 %v2032, %v2024
    %v2609 = vpack.c.b16 %v2033, %v2025
    %v2610 = vpack.c.b16 %v2042, %v2034
    %v2611 = vpack.c.b16 %v2043, %v2035
    %v2612 = vpack.c.b16 %v2044, %v2036
    %v2613 = vpack.c.b16 %v2045, %v2037
    %v2614 = vpack.c.b16 %v2046, %v2038
    %v2615 = vpack.c.b16 %v2047, %v2039
    %v2616 = vpack.c.b16 %v2048, %v2040
    %v2617 = vpack.c.b16 %v2049, %v2041
    %v2618 = vpack.c.b16 %v2058, %v2050
    %v2619 = vpack.c.b16 %v2059, %v2051
    %v2620 = vpack.c.b16 %v2060, %v2052
    %v2621 = vpack.c.b16 %v2061, %v2053
    %v2622 = vpack.c.b16 %v2062, %v2054
    %v2623 = vpack.c.b16 %v2063, %v2055
    %v2624 = vpack.c.b16 %v2064, %v2056
    %v2625 = vpack.c.b16 %v2065, %v2057
    %v2626 = vpack.c.b16 %v2074, %v2066
    %v2627 = vpack.c.b16 %v2075, %v2067
    %v2628 = vpack.c.b16 %v2076, %v2068
    %v2629 = vpack.c.b16 %v2077, %v2069
    %v2630 = vpack.c.b16 %v2078, %v2070
    %v2631 = vpack.c.b16 %v2079, %v2071
    %v2632 = vpack.c.b16 %v2080, %v2072
    %v2633 = vpack.c.b16 %v2081, %v2073
    %v2634 = vpack.c.b16 %v2090, %v2082
    %v2635 = vpack.c.b16 %v2091, %v2083
    %v2636 = vpack.c.b16 %v2092, %v2084
    %v2637 = vpack.c.b16 %v2093, %v2085
    %v2638 = vpack.c.b16 %v2094, %v2086
    %v2639 = vpack.c.b16 %v2095, %v2087
    %v2640 = vpack.c.b16 %v2096, %v2088
    %v2641 = vpack.c.b16 %v2097, %v2089
    %v2642 = vpack.c.b16 %v2106, %v2098
    %v2643 = vpack.c.b16 %v2107, %v2099
    %v2644 = vpack.c.b16 %v2108, %v2100
    %v2645 = vpack.c.b16 %v2109, %v2101
    %v2646 = vpack.c.b16 %v2110, %v2102
    %v2647 = vpack.c.b16 %v2111, %v2103
    %v2648 = vpack.c.b16 %v2112, %v2104
    %v2649 = vpack.c.b16 %v2113, %v2105
    %v2650 = vpack.c.b16 %v2122, %v2114
    %v2651 = vpack.c.b16 %v2123, %v2115
    %v2652 = vpack.c.b16 %v2124, %v2116
    %v2653 = vpack.c.b16 %v2125, %v2117
    %v2654 = vpack.c.b16 %v2126, %v2118
    %v2655 = vpack.c.b16 %v2127, %v2119
    %v2656 = vpack.c.b16 %v2128, %v2120
    %v2657 = vpack.c.b16 %v2129, %v2121
    %v2658 = vpack.c.b16 %v2138, %v2130
    %v2659 = vpack.c.b16 %v2139, %v2131
    %v2660 = vpack.c.b16 %v2140, %v2132
    %v2661 = vpack.c.b16 %v2141, %v2133
    %v2662 = vpack.c.b16 %v2142, %v2134
    %v2663 = vpack.c.b16 %v2143, %v2135
    %v2664 = vpack.c.b16 %v2144, %v2136
    %v2665 = vpack.c.b16 %v2145, %v2137
    %v2666 = vpack.c.b16 %v2154, %v2146
    %v2667 = vpack.c.b16 %v2155, %v2147
    %v2668 = vpack.c.b16 %v2156, %v2148
    %v2669 = vpack.c.b16 %v2157, %v2149
    %v2670 = vpack.c.b16 %v2158, %v2150
    %v2671 = vpack.c.b16 %v2159, %v2151
    %v2672 = vpack.c.b16 %v2160, %v2152
    %v2673 = vpack.c.b16 %v2161, %v2153
    %3186 = vmatprep.subr.bf16.mxu0 %v2219
    %3187 = vmatpush1.bf16.msra.mxu0 %v2218
    %3188 = vmatprep.subr.bf16.mxu0 %v2211
    %3189 = vmatpush1.bf16.msra.mxu0 %v2210
    %3190 = vmatprep.subr.bf16.mxu0 %v2203
    %3191 = vmatpush1.bf16.msra.mxu0 %v2202
    %3192 = vmatprep.subr.bf16.mxu0 %v2195
    %3193 = vmatpush1.bf16.msra.mxu0 %v2194
    %3194 = vmatprep.subr.bf16.mxu0 %v2187
    %3195 = vmatpush1.bf16.msra.mxu0 %v2186
    %3196 = vmatprep.subr.bf16.mxu0 %v2179
    %3197 = vmatpush1.bf16.msra.mxu0 %v2178
    %3198 = vmatprep.subr.bf16.mxu0 %v2171
    %3199 = vmatpush1.bf16.msra.mxu0 %v2170
    %3200 = vmatprep.subr.bf16.mxu0 %v2163
    %3201 = vmatpush1.bf16.msra.mxu0 %v2162
    %3202 = vmatprep.subr.bf16.mxu0 %v2283
    %3203 = vmatpush2.bf16.msra.mxu0 %v2282
    %3204 = vmatprep.subr.bf16.mxu0 %v2275
    %3205 = vmatpush2.bf16.msra.mxu0 %v2274
    %3206 = vmatprep.subr.bf16.mxu0 %v2267
    %3207 = vmatpush2.bf16.msra.mxu0 %v2266
    %3208 = vmatprep.subr.bf16.mxu0 %v2259
    %3209 = vmatpush2.bf16.msra.mxu0 %v2258
    %3210 = vmatprep.subr.bf16.mxu0 %v2251
    %3211 = vmatpush2.bf16.msra.mxu0 %v2250
    %3212 = vmatprep.subr.bf16.mxu0 %v2243
    %3213 = vmatpush2.bf16.msra.mxu0 %v2242
    %3214 = vmatprep.subr.bf16.mxu0 %v2235
    %3215 = vmatpush2.bf16.msra.mxu0 %v2234
    %3216 = vmatprep.subr.bf16.mxu0 %v2227
    %3217 = vmatpush2.bf16.msra.mxu0 %v2226
    %3218 = vmatprep.mubr.bf16.mxu0 %v611
    %3219 = vmatmul.mubr.bf16.gmra.mxu0 %v610
    %v3220 = vpop.f32.mrf.mxu0
    %v3221 = vadd.f32 %v561, %v3220
    %v3222 = vpop.f32.mrf.mxu0
    %v3223 = vadd.f32 %v565, %v3222
    %v3224 = vpop.f32.mrf.mxu0
    %v3225 = vpop.f32.mrf.mxu0
    %3226 = vdwg.mxu0
    %3227 = vmatprep.subr.bf16.mxu0 %v2347
    %3228 = vmatpush1.bf16.msra.mxu0 %v2346
    %3229 = vmatprep.subr.bf16.mxu0 %v2339
    %3230 = vmatpush1.bf16.msra.mxu0 %v2338
    %3231 = vmatprep.subr.bf16.mxu0 %v2331
    %3232 = vmatpush1.bf16.msra.mxu0 %v2330
    %3233 = vmatprep.subr.bf16.mxu0 %v2323
    %3234 = vmatpush1.bf16.msra.mxu0 %v2322
    %3235 = vmatprep.subr.bf16.mxu0 %v2315
    %3236 = vmatpush1.bf16.msra.mxu0 %v2314
    %3237 = vmatprep.subr.bf16.mxu0 %v2307
    %3238 = vmatpush1.bf16.msra.mxu0 %v2306
    %3239 = vmatprep.subr.bf16.mxu0 %v2299
    %3240 = vmatpush1.bf16.msra.mxu0 %v2298
    %3241 = vmatprep.subr.bf16.mxu0 %v2291
    %3242 = vmatpush1.bf16.msra.mxu0 %v2290
    %3243 = vmatprep.subr.bf16.mxu0 %v2411
    %3244 = vmatpush2.bf16.msra.mxu0 %v2410
    %3245 = vmatprep.subr.bf16.mxu0 %v2403
    %3246 = vmatpush2.bf16.msra.mxu0 %v2402
    %3247 = vmatprep.subr.bf16.mxu0 %v2395
    %3248 = vmatpush2.bf16.msra.mxu0 %v2394
    %3249 = vmatprep.subr.bf16.mxu0 %v2387
    %3250 = vmatpush2.bf16.msra.mxu0 %v2386
    %3251 = vmatprep.subr.bf16.mxu0 %v2379
    %3252 = vmatpush2.bf16.msra.mxu0 %v2378
    %3253 = vmatprep.subr.bf16.mxu0 %v2371
    %3254 = vmatpush2.bf16.msra.mxu0 %v2370
    %3255 = vmatprep.subr.bf16.mxu0 %v2363
    %3256 = vmatpush2.bf16.msra.mxu0 %v2362
    %3257 = vmatprep.subr.bf16.mxu0 %v2355
    %3258 = vmatpush2.bf16.msra.mxu0 %v2354
    %3259 = vmatprep.mubr.bf16.mxu0 %v613
    %3260 = vmatmul.mubr.bf16.gmra.mxu0 %v612
    %v3261 = vpop.f32.mrf.mxu0
    %v3262 = vadd.f32 %v3221, %v3261
    %v3263 = vpop.f32.mrf.mxu0
    %v3264 = vadd.f32 %v3223, %v3263
    %v3265 = vpop.f32.mrf.mxu0
    %v3266 = vpop.f32.mrf.mxu0
    %3267 = vdwg.mxu0
    %3268 = vmatprep.subr.bf16.mxu0 %v2475
    %3269 = vmatpush1.bf16.msra.mxu0 %v2474
    %3270 = vmatprep.subr.bf16.mxu0 %v2467
    %3271 = vmatpush1.bf16.msra.mxu0 %v2466
    %3272 = vmatprep.subr.bf16.mxu0 %v2459
    %3273 = vmatpush1.bf16.msra.mxu0 %v2458
    %3274 = vmatprep.subr.bf16.mxu0 %v2451
    %3275 = vmatpush1.bf16.msra.mxu0 %v2450
    %3276 = vmatprep.subr.bf16.mxu0 %v2443
    %3277 = vmatpush1.bf16.msra.mxu0 %v2442
    %3278 = vmatprep.subr.bf16.mxu0 %v2435
    %3279 = vmatpush1.bf16.msra.mxu0 %v2434
    %3280 = vmatprep.subr.bf16.mxu0 %v2427
    %3281 = vmatpush1.bf16.msra.mxu0 %v2426
    %3282 = vmatprep.subr.bf16.mxu0 %v2419
    %3283 = vmatpush1.bf16.msra.mxu0 %v2418
    %3284 = vmatprep.subr.bf16.mxu0 %v2539
    %3285 = vmatpush2.bf16.msra.mxu0 %v2538
    %3286 = vmatprep.subr.bf16.mxu0 %v2531
    %3287 = vmatpush2.bf16.msra.mxu0 %v2530
    %3288 = vmatprep.subr.bf16.mxu0 %v2523
    %3289 = vmatpush2.bf16.msra.mxu0 %v2522
    %3290 = vmatprep.subr.bf16.mxu0 %v2515
    %3291 = vmatpush2.bf16.msra.mxu0 %v2514
    %3292 = vmatprep.subr.bf16.mxu0 %v2507
    %3293 = vmatpush2.bf16.msra.mxu0 %v2506
    %3294 = vmatprep.subr.bf16.mxu0 %v2499
    %3295 = vmatpush2.bf16.msra.mxu0 %v2498
    %3296 = vmatprep.subr.bf16.mxu0 %v2491
    %3297 = vmatpush2.bf16.msra.mxu0 %v2490
    %3298 = vmatprep.subr.bf16.mxu0 %v2483
    %3299 = vmatpush2.bf16.msra.mxu0 %v2482
    %3300 = vmatprep.mubr.bf16.mxu0 %v615
    %3301 = vmatmul.mubr.bf16.gmra.mxu0 %v614
    %v3302 = vpop.f32.mrf.mxu0
    %v3303 = vadd.f32 %v3262, %v3302
    %v3304 = vpop.f32.mrf.mxu0
    %v3305 = vadd.f32 %v3264, %v3304
    %v3306 = vpop.f32.mrf.mxu0
    %v3307 = vpop.f32.mrf.mxu0
    %3308 = vdwg.mxu0
    %3309 = vmatprep.subr.bf16.mxu0 %v2603
    %3310 = vmatpush1.bf16.msra.mxu0 %v2602
    %3311 = vmatprep.subr.bf16.mxu0 %v2595
    %3312 = vmatpush1.bf16.msra.mxu0 %v2594
    %3313 = vmatprep.subr.bf16.mxu0 %v2587
    %3314 = vmatpush1.bf16.msra.mxu0 %v2586
    %3315 = vmatprep.subr.bf16.mxu0 %v2579
    %3316 = vmatpush1.bf16.msra.mxu0 %v2578
    %3317 = vmatprep.subr.bf16.mxu0 %v2571
    %3318 = vmatpush1.bf16.msra.mxu0 %v2570
    %3319 = vmatprep.subr.bf16.mxu0 %v2563
    %3320 = vmatpush1.bf16.msra.mxu0 %v2562
    %3321 = vmatprep.subr.bf16.mxu0 %v2555
    %3322 = vmatpush1.bf16.msra.mxu0 %v2554
    %3323 = vmatprep.subr.bf16.mxu0 %v2547
    %3324 = vmatpush1.bf16.msra.mxu0 %v2546
    %3325 = vmatprep.subr.bf16.mxu0 %v2667
    %3326 = vmatpush2.bf16.msra.mxu0 %v2666
    %3327 = vmatprep.subr.bf16.mxu0 %v2659
    %3328 = vmatpush2.bf16.msra.mxu0 %v2658
    %3329 = vmatprep.subr.bf16.mxu0 %v2651
    %3330 = vmatpush2.bf16.msra.mxu0 %v2650
    %3331 = vmatprep.subr.bf16.mxu0 %v2643
    %3332 = vmatpush2.bf16.msra.mxu0 %v2642
    %3333 = vmatprep.subr.bf16.mxu0 %v2635
    %3334 = vmatpush2.bf16.msra.mxu0 %v2634
    %3335 = vmatprep.subr.bf16.mxu0 %v2627
    %3336 = vmatpush2.bf16.msra.mxu0 %v2626
    %3337 = vmatprep.subr.bf16.mxu0 %v2619
    %3338 = vmatpush2.bf16.msra.mxu0 %v2618
    %3339 = vmatprep.subr.bf16.mxu0 %v2611
    %3340 = vmatpush2.bf16.msra.mxu0 %v2610
    %3341 = vmatprep.mubr.bf16.mxu0 %v617
    %3342 = vmatmul.mubr.bf16.gmra.mxu0 %v616
    %v3343 = vpop.f32.mrf.mxu0
    %v3344 = vadd.f32 %v3303, %v3343
    %v3345 = vpop.f32.mrf.mxu0
    %v3346 = vadd.f32 %v3305, %v3345
    %v3347 = vpop.f32.mrf.mxu0
    %v3348 = vpop.f32.mrf.mxu0
    %3349 = vdwg.mxu0
    %3350 = vmatprep.subr.bf16.mxu0 %v2221
    %3351 = vmatpush1.bf16.msra.mxu0 %v2220
    %3352 = vmatprep.subr.bf16.mxu0 %v2213
    %3353 = vmatpush1.bf16.msra.mxu0 %v2212
    %3354 = vmatprep.subr.bf16.mxu0 %v2205
    %3355 = vmatpush1.bf16.msra.mxu0 %v2204
    %3356 = vmatprep.subr.bf16.mxu0 %v2197
    %3357 = vmatpush1.bf16.msra.mxu0 %v2196
    %3358 = vmatprep.subr.bf16.mxu0 %v2189
    %3359 = vmatpush1.bf16.msra.mxu0 %v2188
    %3360 = vmatprep.subr.bf16.mxu0 %v2181
    %3361 = vmatpush1.bf16.msra.mxu0 %v2180
    %3362 = vmatprep.subr.bf16.mxu0 %v2173
    %3363 = vmatpush1.bf16.msra.mxu0 %v2172
    %3364 = vmatprep.subr.bf16.mxu0 %v2165
    %3365 = vmatpush1.bf16.msra.mxu0 %v2164
    %3366 = vmatprep.subr.bf16.mxu0 %v2285
    %3367 = vmatpush2.bf16.msra.mxu0 %v2284
    %3368 = vmatprep.subr.bf16.mxu0 %v2277
    %3369 = vmatpush2.bf16.msra.mxu0 %v2276
    %3370 = vmatprep.subr.bf16.mxu0 %v2269
    %3371 = vmatpush2.bf16.msra.mxu0 %v2268
    %3372 = vmatprep.subr.bf16.mxu0 %v2261
    %3373 = vmatpush2.bf16.msra.mxu0 %v2260
    %3374 = vmatprep.subr.bf16.mxu0 %v2253
    %3375 = vmatpush2.bf16.msra.mxu0 %v2252
    %3376 = vmatprep.subr.bf16.mxu0 %v2245
    %3377 = vmatpush2.bf16.msra.mxu0 %v2244
    %3378 = vmatprep.subr.bf16.mxu0 %v2237
    %3379 = vmatpush2.bf16.msra.mxu0 %v2236
    %3380 = vmatprep.subr.bf16.mxu0 %v2229
    %3381 = vmatpush2.bf16.msra.mxu0 %v2228
    %3382 = vmatprep.mubr.bf16.mxu0 %v611
    %3383 = vmatmul.mubr.bf16.gmra.mxu0 %v610
    %v3384 = vpop.f32.mrf.mxu0
    %v3385 = vadd.f32 %v569, %v3384
    %v3386 = vpop.f32.mrf.mxu0
    %v3387 = vadd.f32 %v573, %v3386
    %v3388 = vpop.f32.mrf.mxu0
    %v3389 = vpop.f32.mrf.mxu0
    %3390 = vdwg.mxu0
    %3391 = vmatprep.subr.bf16.mxu0 %v2349
    %3392 = vmatpush1.bf16.msra.mxu0 %v2348
    %3393 = vmatprep.subr.bf16.mxu0 %v2341
    %3394 = vmatpush1.bf16.msra.mxu0 %v2340
    %3395 = vmatprep.subr.bf16.mxu0 %v2333
    %3396 = vmatpush1.bf16.msra.mxu0 %v2332
    %3397 = vmatprep.subr.bf16.mxu0 %v2325
    %3398 = vmatpush1.bf16.msra.mxu0 %v2324
    %3399 = vmatprep.subr.bf16.mxu0 %v2317
    %3400 = vmatpush1.bf16.msra.mxu0 %v2316
    %3401 = vmatprep.subr.bf16.mxu0 %v2309
    %3402 = vmatpush1.bf16.msra.mxu0 %v2308
    %3403 = vmatprep.subr.bf16.mxu0 %v2301
    %3404 = vmatpush1.bf16.msra.mxu0 %v2300
    %3405 = vmatprep.subr.bf16.mxu0 %v2293
    %3406 = vmatpush1.bf16.msra.mxu0 %v2292
    %3407 = vmatprep.subr.bf16.mxu0 %v2413
    %3408 = vmatpush2.bf16.msra.mxu0 %v2412
    %3409 = vmatprep.subr.bf16.mxu0 %v2405
    %3410 = vmatpush2.bf16.msra.mxu0 %v2404
    %3411 = vmatprep.subr.bf16.mxu0 %v2397
    %3412 = vmatpush2.bf16.msra.mxu0 %v2396
    %3413 = vmatprep.subr.bf16.mxu0 %v2389
    %3414 = vmatpush2.bf16.msra.mxu0 %v2388
    %3415 = vmatprep.subr.bf16.mxu0 %v2381
    %3416 = vmatpush2.bf16.msra.mxu0 %v2380
    %3417 = vmatprep.subr.bf16.mxu0 %v2373
    %3418 = vmatpush2.bf16.msra.mxu0 %v2372
    %3419 = vmatprep.subr.bf16.mxu0 %v2365
    %3420 = vmatpush2.bf16.msra.mxu0 %v2364
    %3421 = vmatprep.subr.bf16.mxu0 %v2357
    %3422 = vmatpush2.bf16.msra.mxu0 %v2356
    %3423 = vmatprep.mubr.bf16.mxu0 %v613
    %3424 = vmatmul.mubr.bf16.gmra.mxu0 %v612
    %v3425 = vpop.f32.mrf.mxu0
    %v3426 = vadd.f32 %v3385, %v3425
    %v3427 = vpop.f32.mrf.mxu0
    %v3428 = vadd.f32 %v3387, %v3427
    %v3429 = vpop.f32.mrf.mxu0
    %v3430 = vpop.f32.mrf.mxu0
    %3431 = vdwg.mxu0
    %3432 = vmatprep.subr.bf16.mxu0 %v2477
    %3433 = vmatpush1.bf16.msra.mxu0 %v2476
    %3434 = vmatprep.subr.bf16.mxu0 %v2469
    %3435 = vmatpush1.bf16.msra.mxu0 %v2468
    %3436 = vmatprep.subr.bf16.mxu0 %v2461
    %3437 = vmatpush1.bf16.msra.mxu0 %v2460
    %3438 = vmatprep.subr.bf16.mxu0 %v2453
    %3439 = vmatpush1.bf16.msra.mxu0 %v2452
    %3440 = vmatprep.subr.bf16.mxu0 %v2445
    %3441 = vmatpush1.bf16.msra.mxu0 %v2444
    %3442 = vmatprep.subr.bf16.mxu0 %v2437
    %3443 = vmatpush1.bf16.msra.mxu0 %v2436
    %3444 = vmatprep.subr.bf16.mxu0 %v2429
    %3445 = vmatpush1.bf16.msra.mxu0 %v2428
    %3446 = vmatprep.subr.bf16.mxu0 %v2421
    %3447 = vmatpush1.bf16.msra.mxu0 %v2420
    %3448 = vmatprep.subr.bf16.mxu0 %v2541
    %3449 = vmatpush2.bf16.msra.mxu0 %v2540
    %3450 = vmatprep.subr.bf16.mxu0 %v2533
    %3451 = vmatpush2.bf16.msra.mxu0 %v2532
    %3452 = vmatprep.subr.bf16.mxu0 %v2525
    %3453 = vmatpush2.bf16.msra.mxu0 %v2524
    %3454 = vmatprep.subr.bf16.mxu0 %v2517
    %3455 = vmatpush2.bf16.msra.mxu0 %v2516
    %3456 = vmatprep.subr.bf16.mxu0 %v2509
    %3457 = vmatpush2.bf16.msra.mxu0 %v2508
    %3458 = vmatprep.subr.bf16.mxu0 %v2501
    %3459 = vmatpush2.bf16.msra.mxu0 %v2500
    %3460 = vmatprep.subr.bf16.mxu0 %v2493
    %3461 = vmatpush2.bf16.msra.mxu0 %v2492
    %3462 = vmatprep.subr.bf16.mxu0 %v2485
    %3463 = vmatpush2.bf16.msra.mxu0 %v2484
    %3464 = vmatprep.mubr.bf16.mxu0 %v615
    %3465 = vmatmul.mubr.bf16.gmra.mxu0 %v614
    %v3466 = vpop.f32.mrf.mxu0
    %v3467 = vadd.f32 %v3426, %v3466
    %v3468 = vpop.f32.mrf.mxu0
    %v3469 = vadd.f32 %v3428, %v3468
    %v3470 = vpop.f32.mrf.mxu0
    %v3471 = vpop.f32.mrf.mxu0
    %3472 = vdwg.mxu0
    %3473 = vmatprep.subr.bf16.mxu0 %v2605
    %3474 = vmatpush1.bf16.msra.mxu0 %v2604
    %3475 = vmatprep.subr.bf16.mxu0 %v2597
    %3476 = vmatpush1.bf16.msra.mxu0 %v2596
    %3477 = vmatprep.subr.bf16.mxu0 %v2589
    %3478 = vmatpush1.bf16.msra.mxu0 %v2588
    %3479 = vmatprep.subr.bf16.mxu0 %v2581
    %3480 = vmatpush1.bf16.msra.mxu0 %v2580
    %3481 = vmatprep.subr.bf16.mxu0 %v2573
    %3482 = vmatpush1.bf16.msra.mxu0 %v2572
    %3483 = vmatprep.subr.bf16.mxu0 %v2565
    %3484 = vmatpush1.bf16.msra.mxu0 %v2564
    %3485 = vmatprep.subr.bf16.mxu0 %v2557
    %3486 = vmatpush1.bf16.msra.mxu0 %v2556
    %3487 = vmatprep.subr.bf16.mxu0 %v2549
    %3488 = vmatpush1.bf16.msra.mxu0 %v2548
    %3489 = vmatprep.subr.bf16.mxu0 %v2669
    %3490 = vmatpush2.bf16.msra.mxu0 %v2668
    %3491 = vmatprep.subr.bf16.mxu0 %v2661
    %3492 = vmatpush2.bf16.msra.mxu0 %v2660
    %3493 = vmatprep.subr.bf16.mxu0 %v2653
    %3494 = vmatpush2.bf16.msra.mxu0 %v2652
    %3495 = vmatprep.subr.bf16.mxu0 %v2645
    %3496 = vmatpush2.bf16.msra.mxu0 %v2644
    %3497 = vmatprep.subr.bf16.mxu0 %v2637
    %3498 = vmatpush2.bf16.msra.mxu0 %v2636
    %3499 = vmatprep.subr.bf16.mxu0 %v2629
    %3500 = vmatpush2.bf16.msra.mxu0 %v2628
    %3501 = vmatprep.subr.bf16.mxu0 %v2621
    %3502 = vmatpush2.bf16.msra.mxu0 %v2620
    %3503 = vmatprep.subr.bf16.mxu0 %v2613
    %3504 = vmatpush2.bf16.msra.mxu0 %v2612
    %3505 = vmatprep.mubr.bf16.mxu0 %v617
    %3506 = vmatmul.mubr.bf16.gmra.mxu0 %v616
    %v3507 = vpop.f32.mrf.mxu0
    %v3508 = vadd.f32 %v3467, %v3507
    %v3509 = vpop.f32.mrf.mxu0
    %v3510 = vadd.f32 %v3469, %v3509
    %v3511 = vpop.f32.mrf.mxu0
    %v3512 = vpop.f32.mrf.mxu0
    %3513 = vdwg.mxu0
    %3514 = vmatprep.subr.bf16.mxu0 %v2223
    %3515 = vmatpush1.bf16.msra.mxu0 %v2222
    %3516 = vmatprep.subr.bf16.mxu0 %v2215
    %3517 = vmatpush1.bf16.msra.mxu0 %v2214
    %3518 = vmatprep.subr.bf16.mxu0 %v2207
    %3519 = vmatpush1.bf16.msra.mxu0 %v2206
    %3520 = vmatprep.subr.bf16.mxu0 %v2199
    %3521 = vmatpush1.bf16.msra.mxu0 %v2198
    %3522 = vmatprep.subr.bf16.mxu0 %v2191
    %3523 = vmatpush1.bf16.msra.mxu0 %v2190
    %3524 = vmatprep.subr.bf16.mxu0 %v2183
    %3525 = vmatpush1.bf16.msra.mxu0 %v2182
    %3526 = vmatprep.subr.bf16.mxu0 %v2175
    %3527 = vmatpush1.bf16.msra.mxu0 %v2174
    %3528 = vmatprep.subr.bf16.mxu0 %v2167
    %3529 = vmatpush1.bf16.msra.mxu0 %v2166
    %3530 = vmatprep.subr.bf16.mxu0 %v2287
    %3531 = vmatpush2.bf16.msra.mxu0 %v2286
    %3532 = vmatprep.subr.bf16.mxu0 %v2279
    %3533 = vmatpush2.bf16.msra.mxu0 %v2278
    %3534 = vmatprep.subr.bf16.mxu0 %v2271
    %3535 = vmatpush2.bf16.msra.mxu0 %v2270
    %3536 = vmatprep.subr.bf16.mxu0 %v2263
    %3537 = vmatpush2.bf16.msra.mxu0 %v2262
    %3538 = vmatprep.subr.bf16.mxu0 %v2255
    %3539 = vmatpush2.bf16.msra.mxu0 %v2254
    %3540 = vmatprep.subr.bf16.mxu0 %v2247
    %3541 = vmatpush2.bf16.msra.mxu0 %v2246
    %3542 = vmatprep.subr.bf16.mxu0 %v2239
    %3543 = vmatpush2.bf16.msra.mxu0 %v2238
    %3544 = vmatprep.subr.bf16.mxu0 %v2231
    %3545 = vmatpush2.bf16.msra.mxu0 %v2230
    %3546 = vmatprep.mubr.bf16.mxu0 %v611
    %3547 = vmatmul.mubr.bf16.gmra.mxu0 %v610
    %v3548 = vpop.f32.mrf.mxu0
    %v3549 = vadd.f32 %v577, %v3548
    %v3550 = vpop.f32.mrf.mxu0
    %v3551 = vadd.f32 %v581, %v3550
    %v3552 = vpop.f32.mrf.mxu0
    %v3553 = vpop.f32.mrf.mxu0
    %3554 = vdwg.mxu0
    %3555 = vmatprep.subr.bf16.mxu0 %v2351
    %3556 = vmatpush1.bf16.msra.mxu0 %v2350
    %3557 = vmatprep.subr.bf16.mxu0 %v2343
    %3558 = vmatpush1.bf16.msra.mxu0 %v2342
    %3559 = vmatprep.subr.bf16.mxu0 %v2335
    %3560 = vmatpush1.bf16.msra.mxu0 %v2334
    %3561 = vmatprep.subr.bf16.mxu0 %v2327
    %3562 = vmatpush1.bf16.msra.mxu0 %v2326
    %3563 = vmatprep.subr.bf16.mxu0 %v2319
    %3564 = vmatpush1.bf16.msra.mxu0 %v2318
    %3565 = vmatprep.subr.bf16.mxu0 %v2311
    %3566 = vmatpush1.bf16.msra.mxu0 %v2310
    %3567 = vmatprep.subr.bf16.mxu0 %v2303
    %3568 = vmatpush1.bf16.msra.mxu0 %v2302
    %3569 = vmatprep.subr.bf16.mxu0 %v2295
    %3570 = vmatpush1.bf16.msra.mxu0 %v2294
    %3571 = vmatprep.subr.bf16.mxu0 %v2415
    %3572 = vmatpush2.bf16.msra.mxu0 %v2414
    %3573 = vmatprep.subr.bf16.mxu0 %v2407
    %3574 = vmatpush2.bf16.msra.mxu0 %v2406
    %3575 = vmatprep.subr.bf16.mxu0 %v2399
    %3576 = vmatpush2.bf16.msra.mxu0 %v2398
    %3577 = vmatprep.subr.bf16.mxu0 %v2391
    %3578 = vmatpush2.bf16.msra.mxu0 %v2390
    %3579 = vmatprep.subr.bf16.mxu0 %v2383
    %3580 = vmatpush2.bf16.msra.mxu0 %v2382
    %3581 = vmatprep.subr.bf16.mxu0 %v2375
    %3582 = vmatpush2.bf16.msra.mxu0 %v2374
    %3583 = vmatprep.subr.bf16.mxu0 %v2367
    %3584 = vmatpush2.bf16.msra.mxu0 %v2366
    %3585 = vmatprep.subr.bf16.mxu0 %v2359
    %3586 = vmatpush2.bf16.msra.mxu0 %v2358
    %3587 = vmatprep.mubr.bf16.mxu0 %v613
    %3588 = vmatmul.mubr.bf16.gmra.mxu0 %v612
    %v3589 = vpop.f32.mrf.mxu0
    %v3590 = vadd.f32 %v3549, %v3589
    %v3591 = vpop.f32.mrf.mxu0
    %v3592 = vadd.f32 %v3551, %v3591
    %v3593 = vpop.f32.mrf.mxu0
    %v3594 = vpop.f32.mrf.mxu0
    %3595 = vdwg.mxu0
    %3596 = vmatprep.subr.bf16.mxu0 %v2479
    %3597 = vmatpush1.bf16.msra.mxu0 %v2478
    %3598 = vmatprep.subr.bf16.mxu0 %v2471
    %3599 = vmatpush1.bf16.msra.mxu0 %v2470
    %3600 = vmatprep.subr.bf16.mxu0 %v2463
    %3601 = vmatpush1.bf16.msra.mxu0 %v2462
    %3602 = vmatprep.subr.bf16.mxu0 %v2455
    %3603 = vmatpush1.bf16.msra.mxu0 %v2454
    %3604 = vmatprep.subr.bf16.mxu0 %v2447
    %3605 = vmatpush1.bf16.msra.mxu0 %v2446
    %3606 = vmatprep.subr.bf16.mxu0 %v2439
    %3607 = vmatpush1.bf16.msra.mxu0 %v2438
    %3608 = vmatprep.subr.bf16.mxu0 %v2431
    %3609 = vmatpush1.bf16.msra.mxu0 %v2430
    %3610 = vmatprep.subr.bf16.mxu0 %v2423
    %3611 = vmatpush1.bf16.msra.mxu0 %v2422
    %3612 = vmatprep.subr.bf16.mxu0 %v2543
    %3613 = vmatpush2.bf16.msra.mxu0 %v2542
    %3614 = vmatprep.subr.bf16.mxu0 %v2535
    %3615 = vmatpush2.bf16.msra.mxu0 %v2534
    %3616 = vmatprep.subr.bf16.mxu0 %v2527
    %3617 = vmatpush2.bf16.msra.mxu0 %v2526
    %3618 = vmatprep.subr.bf16.mxu0 %v2519
    %3619 = vmatpush2.bf16.msra.mxu0 %v2518
    %3620 = vmatprep.subr.bf16.mxu0 %v2511
    %3621 = vmatpush2.bf16.msra.mxu0 %v2510
    %3622 = vmatprep.subr.bf16.mxu0 %v2503
    %3623 = vmatpush2.bf16.msra.mxu0 %v2502
    %3624 = vmatprep.subr.bf16.mxu0 %v2495
    %3625 = vmatpush2.bf16.msra.mxu0 %v2494
    %3626 = vmatprep.subr.bf16.mxu0 %v2487
    %3627 = vmatpush2.bf16.msra.mxu0 %v2486
    %3628 = vmatprep.mubr.bf16.mxu0 %v615
    %3629 = vmatmul.mubr.bf16.gmra.mxu0 %v614
    %v3630 = vpop.f32.mrf.mxu0
    %v3631 = vadd.f32 %v3590, %v3630
    %v3632 = vpop.f32.mrf.mxu0
    %v3633 = vadd.f32 %v3592, %v3632
    %v3634 = vpop.f32.mrf.mxu0
    %v3635 = vpop.f32.mrf.mxu0
    %3636 = vdwg.mxu0
    %3637 = vmatprep.subr.bf16.mxu0 %v2607
    %3638 = vmatpush1.bf16.msra.mxu0 %v2606
    %3639 = vmatprep.subr.bf16.mxu0 %v2599
    %3640 = vmatpush1.bf16.msra.mxu0 %v2598
    %3641 = vmatprep.subr.bf16.mxu0 %v2591
    %3642 = vmatpush1.bf16.msra.mxu0 %v2590
    %3643 = vmatprep.subr.bf16.mxu0 %v2583
    %3644 = vmatpush1.bf16.msra.mxu0 %v2582
    %3645 = vmatprep.subr.bf16.mxu0 %v2575
    %3646 = vmatpush1.bf16.msra.mxu0 %v2574
    %3647 = vmatprep.subr.bf16.mxu0 %v2567
    %3648 = vmatpush1.bf16.msra.mxu0 %v2566
    %3649 = vmatprep.subr.bf16.mxu0 %v2559
    %3650 = vmatpush1.bf16.msra.mxu0 %v2558
    %3651 = vmatprep.subr.bf16.mxu0 %v2551
    %3652 = vmatpush1.bf16.msra.mxu0 %v2550
    %3653 = vmatprep.subr.bf16.mxu0 %v2671
    %3654 = vmatpush2.bf16.msra.mxu0 %v2670
    %3655 = vmatprep.subr.bf16.mxu0 %v2663
    %3656 = vmatpush2.bf16.msra.mxu0 %v2662
    %3657 = vmatprep.subr.bf16.mxu0 %v2655
    %3658 = vmatpush2.bf16.msra.mxu0 %v2654
    %3659 = vmatprep.subr.bf16.mxu0 %v2647
    %3660 = vmatpush2.bf16.msra.mxu0 %v2646
    %3661 = vmatprep.subr.bf16.mxu0 %v2639
    %3662 = vmatpush2.bf16.msra.mxu0 %v2638
    %3663 = vmatprep.subr.bf16.mxu0 %v2631
    %3664 = vmatpush2.bf16.msra.mxu0 %v2630
    %3665 = vmatprep.subr.bf16.mxu0 %v2623
    %3666 = vmatpush2.bf16.msra.mxu0 %v2622
    %3667 = vmatprep.subr.bf16.mxu0 %v2615
    %3668 = vmatpush2.bf16.msra.mxu0 %v2614
    %3669 = vmatprep.mubr.bf16.mxu0 %v617
    %3670 = vmatmul.mubr.bf16.gmra.mxu0 %v616
    %v3671 = vpop.f32.mrf.mxu0
    %v3672 = vadd.f32 %v3631, %v3671
    %v3673 = vpop.f32.mrf.mxu0
    %v3674 = vadd.f32 %v3633, %v3673
    %v3675 = vpop.f32.mrf.mxu0
    %v3676 = vpop.f32.mrf.mxu0
    %3677 = vdwg.mxu0
    %3678 = vmatprep.subr.bf16.mxu0 %v2225
    %3679 = vmatpush1.bf16.msra.mxu0 %v2224
    %3680 = vmatprep.subr.bf16.mxu0 %v2217
    %3681 = vmatpush1.bf16.msra.mxu0 %v2216
    %3682 = vmatprep.subr.bf16.mxu0 %v2209
    %3683 = vmatpush1.bf16.msra.mxu0 %v2208
    %3684 = vmatprep.subr.bf16.mxu0 %v2201
    %3685 = vmatpush1.bf16.msra.mxu0 %v2200
    %3686 = vmatprep.subr.bf16.mxu0 %v2193
    %3687 = vmatpush1.bf16.msra.mxu0 %v2192
    %3688 = vmatprep.subr.bf16.mxu0 %v2185
    %3689 = vmatpush1.bf16.msra.mxu0 %v2184
    %3690 = vmatprep.subr.bf16.mxu0 %v2177
    %3691 = vmatpush1.bf16.msra.mxu0 %v2176
    %3692 = vmatprep.subr.bf16.mxu0 %v2169
    %3693 = vmatpush1.bf16.msra.mxu0 %v2168
    %3694 = vmatprep.subr.bf16.mxu0 %v2289
    %3695 = vmatpush2.bf16.msra.mxu0 %v2288
    %3696 = vmatprep.subr.bf16.mxu0 %v2281
    %3697 = vmatpush2.bf16.msra.mxu0 %v2280
    %3698 = vmatprep.subr.bf16.mxu0 %v2273
    %3699 = vmatpush2.bf16.msra.mxu0 %v2272
    %3700 = vmatprep.subr.bf16.mxu0 %v2265
    %3701 = vmatpush2.bf16.msra.mxu0 %v2264
    %3702 = vmatprep.subr.bf16.mxu0 %v2257
    %3703 = vmatpush2.bf16.msra.mxu0 %v2256
    %3704 = vmatprep.subr.bf16.mxu0 %v2249
    %3705 = vmatpush2.bf16.msra.mxu0 %v2248
    %3706 = vmatprep.subr.bf16.mxu0 %v2241
    %3707 = vmatpush2.bf16.msra.mxu0 %v2240
    %3708 = vmatprep.subr.bf16.mxu0 %v2233
    %3709 = vmatpush2.bf16.msra.mxu0 %v2232
    %3710 = vmatprep.mubr.bf16.mxu0 %v611
    %3711 = vmatmul.mubr.bf16.gmra.mxu0 %v610
    %v3712 = vpop.f32.mrf.mxu0
    %v3713 = vadd.f32 %v585, %v3712
    %v3714 = vpop.f32.mrf.mxu0
    %v3715 = vadd.f32 %v589, %v3714
    %v3716 = vpop.f32.mrf.mxu0
    %v3717 = vpop.f32.mrf.mxu0
    %3718 = vdwg.mxu0
    %3719 = vmatprep.subr.bf16.mxu0 %v2353
    %3720 = vmatpush1.bf16.msra.mxu0 %v2352
    %3721 = vmatprep.subr.bf16.mxu0 %v2345
    %3722 = vmatpush1.bf16.msra.mxu0 %v2344
    %3723 = vmatprep.subr.bf16.mxu0 %v2337
    %3724 = vmatpush1.bf16.msra.mxu0 %v2336
    %3725 = vmatprep.subr.bf16.mxu0 %v2329
    %3726 = vmatpush1.bf16.msra.mxu0 %v2328
    %3727 = vmatprep.subr.bf16.mxu0 %v2321
    %3728 = vmatpush1.bf16.msra.mxu0 %v2320
    %3729 = vmatprep.subr.bf16.mxu0 %v2313
    %3730 = vmatpush1.bf16.msra.mxu0 %v2312
    %3731 = vmatprep.subr.bf16.mxu0 %v2305
    %3732 = vmatpush1.bf16.msra.mxu0 %v2304
    %3733 = vmatprep.subr.bf16.mxu0 %v2297
    %3734 = vmatpush1.bf16.msra.mxu0 %v2296
    %3735 = vmatprep.subr.bf16.mxu0 %v2417
    %3736 = vmatpush2.bf16.msra.mxu0 %v2416
    %3737 = vmatprep.subr.bf16.mxu0 %v2409
    %3738 = vmatpush2.bf16.msra.mxu0 %v2408
    %3739 = vmatprep.subr.bf16.mxu0 %v2401
    %3740 = vmatpush2.bf16.msra.mxu0 %v2400
    %3741 = vmatprep.subr.bf16.mxu0 %v2393
    %3742 = vmatpush2.bf16.msra.mxu0 %v2392
    %3743 = vmatprep.subr.bf16.mxu0 %v2385
    %3744 = vmatpush2.bf16.msra.mxu0 %v2384
    %3745 = vmatprep.subr.bf16.mxu0 %v2377
    %3746 = vmatpush2.bf16.msra.mxu0 %v2376
    %3747 = vmatprep.subr.bf16.mxu0 %v2369
    %3748 = vmatpush2.bf16.msra.mxu0 %v2368
    %3749 = vmatprep.subr.bf16.mxu0 %v2361
    %3750 = vmatpush2.bf16.msra.mxu0 %v2360
    %3751 = vmatprep.mubr.bf16.mxu0 %v613
    %3752 = vmatmul.mubr.bf16.gmra.mxu0 %v612
    %v3753 = vpop.f32.mrf.mxu0
    %v3754 = vadd.f32 %v3713, %v3753
    %v3755 = vpop.f32.mrf.mxu0
    %v3756 = vadd.f32 %v3715, %v3755
    %v3757 = vpop.f32.mrf.mxu0
    %v3758 = vpop.f32.mrf.mxu0
    %3759 = vdwg.mxu0
    %3760 = vmatprep.subr.bf16.mxu0 %v2481
    %3761 = vmatpush1.bf16.msra.mxu0 %v2480
    %3762 = vmatprep.subr.bf16.mxu0 %v2473
    %3763 = vmatpush1.bf16.msra.mxu0 %v2472
    %3764 = vmatprep.subr.bf16.mxu0 %v2465
    %3765 = vmatpush1.bf16.msra.mxu0 %v2464
    %3766 = vmatprep.subr.bf16.mxu0 %v2457
    %3767 = vmatpush1.bf16.msra.mxu0 %v2456
    %3768 = vmatprep.subr.bf16.mxu0 %v2449
    %3769 = vmatpush1.bf16.msra.mxu0 %v2448
    %3770 = vmatprep.subr.bf16.mxu0 %v2441
    %3771 = vmatpush1.bf16.msra.mxu0 %v2440
    %3772 = vmatprep.subr.bf16.mxu0 %v2433
    %3773 = vmatpush1.bf16.msra.mxu0 %v2432
    %3774 = vmatprep.subr.bf16.mxu0 %v2425
    %3775 = vmatpush1.bf16.msra.mxu0 %v2424
    %3776 = vmatprep.subr.bf16.mxu0 %v2545
    %3777 = vmatpush2.bf16.msra.mxu0 %v2544
    %3778 = vmatprep.subr.bf16.mxu0 %v2537
    %3779 = vmatpush2.bf16.msra.mxu0 %v2536
    %3780 = vmatprep.subr.bf16.mxu0 %v2529
    %3781 = vmatpush2.bf16.msra.mxu0 %v2528
    %3782 = vmatprep.subr.bf16.mxu0 %v2521
    %3783 = vmatpush2.bf16.msra.mxu0 %v2520
    %3784 = vmatprep.subr.bf16.mxu0 %v2513
    %3785 = vmatpush2.bf16.msra.mxu0 %v2512
    %3786 = vmatprep.subr.bf16.mxu0 %v2505
    %3787 = vmatpush2.bf16.msra.mxu0 %v2504
    %3788 = vmatprep.subr.bf16.mxu0 %v2497
    %3789 = vmatpush2.bf16.msra.mxu0 %v2496
    %3790 = vmatprep.subr.bf16.mxu0 %v2489
    %3791 = vmatpush2.bf16.msra.mxu0 %v2488
    %3792 = vmatprep.mubr.bf16.mxu0 %v615
    %3793 = vmatmul.mubr.bf16.gmra.mxu0 %v614
    %v3794 = vpop.f32.mrf.mxu0
    %v3795 = vadd.f32 %v3754, %v3794
    %v3796 = vpop.f32.mrf.mxu0
    %v3797 = vadd.f32 %v3756, %v3796
    %v3798 = vpop.f32.mrf.mxu0
    %v3799 = vpop.f32.mrf.mxu0
    %3800 = vdwg.mxu0
    %3801 = vmatprep.subr.bf16.mxu0 %v2609
    %3802 = vmatpush1.bf16.msra.mxu0 %v2608
    %3803 = vmatprep.subr.bf16.mxu0 %v2601
    %3804 = vmatpush1.bf16.msra.mxu0 %v2600
    %3805 = vmatprep.subr.bf16.mxu0 %v2593
    %3806 = vmatpush1.bf16.msra.mxu0 %v2592
    %3807 = vmatprep.subr.bf16.mxu0 %v2585
    %3808 = vmatpush1.bf16.msra.mxu0 %v2584
    %3809 = vmatprep.subr.bf16.mxu0 %v2577
    %3810 = vmatpush1.bf16.msra.mxu0 %v2576
    %3811 = vmatprep.subr.bf16.mxu0 %v2569
    %3812 = vmatpush1.bf16.msra.mxu0 %v2568
    %3813 = vmatprep.subr.bf16.mxu0 %v2561
    %3814 = vmatpush1.bf16.msra.mxu0 %v2560
    %3815 = vmatprep.subr.bf16.mxu0 %v2553
    %3816 = vmatpush1.bf16.msra.mxu0 %v2552
    %3817 = vmatprep.subr.bf16.mxu0 %v2673
    %3818 = vmatpush2.bf16.msra.mxu0 %v2672
    %3819 = vmatprep.subr.bf16.mxu0 %v2665
    %3820 = vmatpush2.bf16.msra.mxu0 %v2664
    %3821 = vmatprep.subr.bf16.mxu0 %v2657
    %3822 = vmatpush2.bf16.msra.mxu0 %v2656
    %3823 = vmatprep.subr.bf16.mxu0 %v2649
    %3824 = vmatpush2.bf16.msra.mxu0 %v2648
    %3825 = vmatprep.subr.bf16.mxu0 %v2641
    %3826 = vmatpush2.bf16.msra.mxu0 %v2640
    %3827 = vmatprep.subr.bf16.mxu0 %v2633
    %3828 = vmatpush2.bf16.msra.mxu0 %v2632
    %3829 = vmatprep.subr.bf16.mxu0 %v2625
    %3830 = vmatpush2.bf16.msra.mxu0 %v2624
    %3831 = vmatprep.subr.bf16.mxu0 %v2617
    %3832 = vmatpush2.bf16.msra.mxu0 %v2616
    %3833 = vmatprep.mubr.bf16.mxu0 %v617
    %3834 = vmatmul.mubr.bf16.gmra.mxu0 %v616
    %v3835 = vpop.f32.mrf.mxu0
    %v3836 = vadd.f32 %v3795, %v3835
    %v3837 = vpop.f32.mrf.mxu0
    %v3838 = vadd.f32 %v3797, %v3837
    %v3839 = vpop.f32.mrf.mxu0
    %v3840 = vpop.f32.mrf.mxu0
    %3841 = vdwg.mxu0
    %3842 = vst [vmem:[%s3] sm:$0xff] %v3344
    %3843 = vst [vmem:[%s3 + $0x8] sm:$0xff] %v3346
    %3844 = vst [vmem:[%s3 + $0x10] sm:$0xff] %v3508
    %3845 = vst [vmem:[%s3 + $0x18] sm:$0xff] %v3510
    %3846 = vst [vmem:[%s3 + $0x20] sm:$0xff] %v3672
    %3847 = vst [vmem:[%s3 + $0x28] sm:$0xff] %v3674
    %3848 = vst [vmem:[%s3 + $0x30] sm:$0xff] %v3836
    %3849 = vst [vmem:[%s3 + $0x38] sm:$0xff] %v3838
    // Predicated region
    $region22: #{linear_classifier.1} parent=1 // pred_check
      _
    $region23: #{linear_classifier.1} parent=1 // pred_check_branch
      %3851 = sbr.rel (0) target = $region25
    $region24: #{linear_classifier.1} parent=1 // pred_region
      _
    $region25: #{linear_classifier.1} parent=1 // pred_fallthru
      _
    // Predicated region
    $region26: #{linear_classifier.1} parent=1 // pred_check
      _
    $region27: #{linear_classifier.1} parent=1 // pred_check_branch
      %3853 = sbr.rel (0) target = $region29
    $region28: #{linear_classifier.1} parent=1 // pred_region
      _
    $region29: #{linear_classifier.1} parent=1 // pred_fallthru
      _
    %3854 = vsyncpa [#allocation3], 1
    %3855 = vsyncpa [#allocation5], 1

</llo_original>
